<compile_context>
chip_gen: v5e
topology: v5e:2x2
jax: 0.10.0
libtpu: 0.0.40
codegen_flags: <defaults>
</compile_context>

<pallas_src>
import functools

import jax
import jax.numpy as jnp
import numpy as np
from jax.experimental import pallas as pl
from jax.experimental.pallas import tpu as pltpu


def _round_up(x, m):
    return ((x + m - 1) // m) * m


def spatial_attention_kernel(x_ref, w_ref, mask_ref, out_ref, *, width, ksize, lpad):
    # x_ref    : (Bt, C, HW)   VMEM, lane-dense
    # w_ref    : (K*K*2,)      SMEM, flat conv weights in (dy, dx, [avg, max]) order
    # mask_ref : (K, HW)       VMEM, f32 horizontal-validity masks, one row per dx
    # out_ref  : (Bt, C, HW)   VMEM
    bt, chans, hw = x_ref.shape
    pad = (ksize - 1) // 2
    inv_c = 1.0 / chans

    # Zero extension so vertical roll wrap-around lands in zeros.
    zext = jnp.zeros((1, lpad - hw), jnp.float32)
    # Horizontal row-boundary masks (one (1, HW) row per dx offset), hoisted.
    mask_rows = [mask_ref[pl.ds(dx, 1), :] for dx in range(ksize)]

    for bi in range(bt):
        xb = x_ref[bi].astype(jnp.float32)                     # (C, HW)
        # Channel reduce over the sublane axis (let Mosaic pick the codegen).
        avg_row = jnp.sum(xb, axis=0, keepdims=True) * inv_c   # (1, HW)
        max_row = jnp.max(xb, axis=0, keepdims=True)           # (1, HW)
        avg_p = jnp.concatenate([avg_row, zext], axis=1)       # (1, Lp)
        max_p = jnp.concatenate([max_row, zext], axis=1)       # (1, Lp)

        acc = jnp.zeros((1, hw), jnp.float32)
        for dx in range(ksize):
            sx = dx - pad
            col_acc = None                                     # (1, Lp)
            for dy in range(ksize):
                sy = dy - pad
                s = sy * width + sx                            # flat tap shift
                wa = w_ref[(dy * ksize + dx) * 2 + 0]
                wm = w_ref[(dy * ksize + dx) * 2 + 1]
                a = avg_p if s == 0 else pltpu.roll(avg_p, (-s) % lpad, axis=1)
                m = max_p if s == 0 else pltpu.roll(max_p, (-s) % lpad, axis=1)
                c = a * wa + m * wm
                col_acc = c if col_acc is None else col_acc + c
            # One mask multiply per dx column handles the row-boundary zero pad.
            acc = acc + col_acc[:, :hw] * mask_rows[dx]

        attn = jax.nn.sigmoid(acc)                             # (1, HW)
        # Fused lane-dense store: x * attn broadcast over the channel sublanes.
        out_ref[bi] = (xb * attn).astype(out_ref.dtype)


def _pick_batch_tile(batch, bytes_per_batch, target_bytes=1 << 20):
    """Largest divisor of `batch` with tile <= ~1 MiB and grid length >= 2."""
    cap = max(1, target_bytes // max(1, bytes_per_batch))
    best = 1
    for bt in range(1, batch + 1):
        if batch % bt != 0 or bt > cap:
            continue
        if batch // bt >= 2 or batch == 1:
            best = bt
    return best


def spatial_attention_forward(x, conv_w):
    """x: (B, C, H, W); conv_w: PyTorch Conv2d weight of shape (1, 2, K, K)
    (or (2, K, K)): input channel 0 multiplies the channel-mean map, channel 1
    the channel-max map. Returns (B, C, H, W) of x.dtype."""
    batch, chans, height, width = x.shape
    w = jnp.asarray(conv_w, jnp.float32)
    if w.ndim == 4:
        assert w.shape[:2] == (1, 2), f"expected Conv2d(2->1) weight, got {w.shape}"
        w = w[0]
    assert w.ndim == 3 and w.shape[0] == 2 and w.shape[1] == w.shape[2], w.shape
    ksize = int(w.shape[1])
    assert ksize % 2 == 1
    pad = (ksize - 1) // 2

    hw = height * width
    lpad = _round_up(hw + pad * width + pad, 128)

    # (dy, dx, [avg, max])-ordered flat weights for SMEM scalar reads.
    w_flat = jnp.transpose(w, (1, 2, 0)).reshape(-1)           # (K*K*2,)

    # Horizontal validity masks: mask[dx, h*W + w] = 1 iff 0 <= w + (dx-pad) < W.
    wcol = np.arange(hw, dtype=np.int64) % width
    masks = np.stack(
        [((wcol + (dx - pad) >= 0) & (wcol + (dx - pad) < width)).astype(np.float32)
         for dx in range(ksize)], axis=0)                      # (K, HW)
    masks = jnp.asarray(masks)

    x2 = x.reshape(batch, chans, hw)                           # free minor-dim collapse

    bytes_per_batch = chans * hw * x.dtype.itemsize
    bt = _pick_batch_tile(batch, bytes_per_batch)
    grid = (batch // bt,)

    block_bytes = bt * bytes_per_batch
    # 2x double-buffered in + 2x double-buffered out + masks + headroom.
    vmem_limit = int(min(4 * block_bytes + 2 * masks.size * 4 + (8 << 20), 100 << 20))

    kernel = functools.partial(spatial_attention_kernel,
                               width=width, ksize=ksize, lpad=lpad)
    out2 = pl.pallas_call(
        kernel,
        out_shape=jax.ShapeDtypeStruct((batch, chans, hw), x.dtype),
        grid=grid,
        in_specs=[
            pl.BlockSpec((bt, chans, hw), lambda b: (b, 0, 0)),
            pl.BlockSpec(memory_space=pltpu.MemorySpace.SMEM),
            pl.BlockSpec((ksize, hw), lambda b: (0, 0)),
        ],
        out_specs=pl.BlockSpec((bt, chans, hw), lambda b: (b, 0, 0)),
        compiler_params=pltpu.CompilerParams(
            dimension_semantics=("parallel",),
            vmem_limit_bytes=vmem_limit),
    )(x2, w_flat, masks)
    return out2.reshape(batch, chans, height, width)


def reference_forward(x, conv_w):
    """Pure-JAX reference mirroring the PyTorch SpatialAttention forward (NCHW)."""
    w = jnp.asarray(conv_w, jnp.float32)
    if w.ndim == 4:
        w = w[0]
    ksize = w.shape[-1]
    pad = (ksize - 1) // 2
    batch, chans, height, width = x.shape
    avg = jnp.mean(x, axis=1)                                  # (B, H, W)
    mx = jnp.max(x, axis=1)                                    # (B, H, W)
    ap = jnp.pad(avg, ((0, 0), (pad, pad), (pad, pad)))
    mp = jnp.pad(mx, ((0, 0), (pad, pad), (pad, pad)))
    acc = jnp.zeros((batch, height, width), jnp.float32)
    for dy in range(ksize):
        for dx in range(ksize):
            acc = acc + ap[:, dy:dy + height, dx:dx + width] * w[0, dy, dx] \
                      + mp[:, dy:dy + height, dx:dx + width] * w[1, dy, dx]
    attn = jax.nn.sigmoid(acc)
    return x * attn[:, None, :, :]


if __name__ == "__main__":
    B, C, H, W = 2, 4, 16, 16
    key = jax.random.PRNGKey(0)
    kx, kw = jax.random.split(key)
    x = jax.random.normal(kx, (B, C, H, W), jnp.float32)
    conv_w = jax.random.normal(kw, (1, 2, 7, 7), jnp.float32) * 0.1   # PyTorch layout

    out = spatial_attention_forward(x, conv_w)
    out = jax.block_until_ready(out)

    ref = reference_forward(x, conv_w)
    max_diff = float(jnp.max(jnp.abs(out - ref)))
    assert out.shape == (B, C, H, W), out.shape
    assert max_diff < 1e-3, f"mismatch vs reference: {max_diff}"
    print("KERNEL_OK")
</pallas_src>

<mosaic_0001>
module attributes {stable_mosaic.version = 11 : i64} {
  func.func @spatial_attention_kernel(%arg0: i32, %arg1: memref<1x4x256xf32, #tpu.memory_space<vmem>>, %arg2: memref<98xf32, #tpu.memory_space<smem>>, %arg3: memref<7x256xf32, #tpu.memory_space<vmem>>, %arg4: memref<1x4x256xf32, #tpu.memory_space<vmem>>) attributes {dimension_semantics = [#tpu.dimension_semantics<parallel>], iteration_bounds = array<i64: 2>, scalar_prefetch = 0 : i64, scratch_operands = 0 : i64, tpu.core_type = #tpu.core_type<tc>, window_params = [{transform_indices = @transform_0, window_bounds = array<i64: 1, 4, 256>}, {transform_indices = @transform_1, window_bounds = array<i64: 98>}, {pipeline_mode = #tpu.pipeline_mode<synchronous>, transform_indices = @transform_2, window_bounds = array<i64: 7, 256>}, {transform_indices = @transform_3, window_bounds = array<i64: 1, 4, 256>}]} {
    %cst = arith.constant 0.000000e+00 : f32
    %0 = vector.broadcast %cst : f32 to vector<1x128xf32>
    %c0 = arith.constant 0 : index
    %c0_0 = arith.constant 0 : index
    %1 = vector.load %arg3[%c0, %c0_0] : memref<7x256xf32, #tpu.memory_space<vmem>>, vector<1x256xf32>
    %c1 = arith.constant 1 : index
    %c0_1 = arith.constant 0 : index
    %2 = vector.load %arg3[%c1, %c0_1] : memref<7x256xf32, #tpu.memory_space<vmem>>, vector<1x256xf32>
    %c2 = arith.constant 2 : index
    %c0_2 = arith.constant 0 : index
    %3 = vector.load %arg3[%c2, %c0_2] : memref<7x256xf32, #tpu.memory_space<vmem>>, vector<1x256xf32>
    %c3 = arith.constant 3 : index
    %c0_3 = arith.constant 0 : index
    %4 = vector.load %arg3[%c3, %c0_3] : memref<7x256xf32, #tpu.memory_space<vmem>>, vector<1x256xf32>
    %c4 = arith.constant 4 : index
    %c0_4 = arith.constant 0 : index
    %5 = vector.load %arg3[%c4, %c0_4] : memref<7x256xf32, #tpu.memory_space<vmem>>, vector<1x256xf32>
    %c5 = arith.constant 5 : index
    %c0_5 = arith.constant 0 : index
    %6 = vector.load %arg3[%c5, %c0_5] : memref<7x256xf32, #tpu.memory_space<vmem>>, vector<1x256xf32>
    %c6 = arith.constant 6 : index
    %c0_6 = arith.constant 0 : index
    %7 = vector.load %arg3[%c6, %c0_6] : memref<7x256xf32, #tpu.memory_space<vmem>>, vector<1x256xf32>
    %c0_7 = arith.constant 0 : index
    %c0_8 = arith.constant 0 : index
    %c0_9 = arith.constant 0 : index
    %8 = vector.load %arg1[%c0_7, %c0_8, %c0_9] : memref<1x4x256xf32, #tpu.memory_space<vmem>>, vector<1x4x256xf32>
    %9 = vector.shape_cast %8 : vector<1x4x256xf32> to vector<4x256xf32>
    %cst_10 = arith.constant dense<0.000000e+00> : vector<256xf32>
    %10 = vector.multi_reduction <add>, %9, %cst_10 [0] : vector<4x256xf32> to vector<256xf32>
    %11 = vector.shape_cast %10 : vector<256xf32> to vector<1x256xf32>
    %cst_11 = arith.constant 2.500000e-01 : f32
    %12 = vector.broadcast %cst_11 : f32 to vector<1x256xf32>
    %13 = arith.mulf %11, %12 : vector<1x256xf32>
    %cst_12 = arith.constant dense<0xFF800000> : vector<256xf32>
    %14 = vector.multi_reduction <maximumf>, %9, %cst_12 [0] : vector<4x256xf32> to vector<256xf32>
    %15 = vector.shape_cast %14 : vector<256xf32> to vector<1x256xf32>
    %16 = tpu.concatenate %13, %0 in 1 : vector<1x256xf32>, vector<1x128xf32> -> vector<1x384xf32>
    %17 = tpu.concatenate %15, %0 in 1 : vector<1x256xf32>, vector<1x128xf32> -> vector<1x384xf32>
    %cst_13 = arith.constant 0.000000e+00 : f32
    %18 = vector.broadcast %cst_13 : f32 to vector<1x256xf32>
    %c0_14 = arith.constant 0 : index
    %19 = memref.load %arg2[%c0_14] : memref<98xf32, #tpu.memory_space<smem>>
    %c1_15 = arith.constant 1 : index
    %20 = memref.load %arg2[%c1_15] : memref<98xf32, #tpu.memory_space<smem>>
    %c51_i32 = arith.constant 51 : i32
    %21 = tpu.dynamic_rotate %16 by %c51_i32 dim 1 : vector<1x384xf32>, i32 -> vector<1x384xf32>
    %c51_i32_16 = arith.constant 51 : i32
    %22 = tpu.dynamic_rotate %17 by %c51_i32_16 dim 1 : vector<1x384xf32>, i32 -> vector<1x384xf32>
    %23 = vector.broadcast %19 : f32 to vector<1x384xf32>
    %24 = arith.mulf %21, %23 : vector<1x384xf32>
    %25 = vector.broadcast %20 : f32 to vector<1x384xf32>
    %26 = arith.mulf %22, %25 : vector<1x384xf32>
    %27 = arith.addf %24, %26 : vector<1x384xf32>
    %c14 = arith.constant 14 : index
    %28 = memref.load %arg2[%c14] : memref<98xf32, #tpu.memory_space<smem>>
    %c15 = arith.constant 15 : index
    %29 = memref.load %arg2[%c15] : memref<98xf32, #tpu.memory_space<smem>>
    %c35_i32 = arith.constant 35 : i32
    %30 = tpu.dynamic_rotate %16 by %c35_i32 dim 1 : vector<1x384xf32>, i32 -> vector<1x384xf32>
    %c35_i32_17 = arith.constant 35 : i32
    %31 = tpu.dynamic_rotate %17 by %c35_i32_17 dim 1 : vector<1x384xf32>, i32 -> vector<1x384xf32>
    %32 = vector.broadcast %28 : f32 to vector<1x384xf32>
    %33 = arith.mulf %30, %32 : vector<1x384xf32>
    %34 = vector.broadcast %29 : f32 to vector<1x384xf32>
    %35 = arith.mulf %31, %34 : vector<1x384xf32>
    %36 = arith.addf %33, %35 : vector<1x384xf32>
    %37 = arith.addf %27, %36 : vector<1x384xf32>
    %c28 = arith.constant 28 : index
    %38 = memref.load %arg2[%c28] : memref<98xf32, #tpu.memory_space<smem>>
    %c29 = arith.constant 29 : index
    %39 = memref.load %arg2[%c29] : memref<98xf32, #tpu.memory_space<smem>>
    %c19_i32 = arith.constant 19 : i32
    %40 = tpu.dynamic_rotate %16 by %c19_i32 dim 1 : vector<1x384xf32>, i32 -> vector<1x384xf32>
    %c19_i32_18 = arith.constant 19 : i32
    %41 = tpu.dynamic_rotate %17 by %c19_i32_18 dim 1 : vector<1x384xf32>, i32 -> vector<1x384xf32>
    %42 = vector.broadcast %38 : f32 to vector<1x384xf32>
    %43 = arith.mulf %40, %42 : vector<1x384xf32>
    %44 = vector.broadcast %39 : f32 to vector<1x384xf32>
    %45 = arith.mulf %41, %44 : vector<1x384xf32>
    %46 = arith.addf %43, %45 : vector<1x384xf32>
    %47 = arith.addf %37, %46 : vector<1x384xf32>
    %c42 = arith.constant 42 : index
    %48 = memref.load %arg2[%c42] : memref<98xf32, #tpu.memory_space<smem>>
    %c43 = arith.constant 43 : index
    %49 = memref.load %arg2[%c43] : memref<98xf32, #tpu.memory_space<smem>>
    %c3_i32 = arith.constant 3 : i32
    %50 = tpu.dynamic_rotate %16 by %c3_i32 dim 1 : vector<1x384xf32>, i32 -> vector<1x384xf32>
    %c3_i32_19 = arith.constant 3 : i32
    %51 = tpu.dynamic_rotate %17 by %c3_i32_19 dim 1 : vector<1x384xf32>, i32 -> vector<1x384xf32>
    %52 = vector.broadcast %48 : f32 to vector<1x384xf32>
    %53 = arith.mulf %50, %52 : vector<1x384xf32>
    %54 = vector.broadcast %49 : f32 to vector<1x384xf32>
    %55 = arith.mulf %51, %54 : vector<1x384xf32>
    %56 = arith.addf %53, %55 : vector<1x384xf32>
    %57 = arith.addf %47, %56 : vector<1x384xf32>
    %c56 = arith.constant 56 : index
    %58 = memref.load %arg2[%c56] : memref<98xf32, #tpu.memory_space<smem>>
    %c57 = arith.constant 57 : index
    %59 = memref.load %arg2[%c57] : memref<98xf32, #tpu.memory_space<smem>>
    %c371_i32 = arith.constant 371 : i32
    %60 = tpu.dynamic_rotate %16 by %c371_i32 dim 1 : vector<1x384xf32>, i32 -> vector<1x384xf32>
    %c371_i32_20 = arith.constant 371 : i32
    %61 = tpu.dynamic_rotate %17 by %c371_i32_20 dim 1 : vector<1x384xf32>, i32 -> vector<1x384xf32>
    %62 = vector.broadcast %58 : f32 to vector<1x384xf32>
    %63 = arith.mulf %60, %62 : vector<1x384xf32>
    %64 = vector.broadcast %59 : f32 to vector<1x384xf32>
    %65 = arith.mulf %61, %64 : vector<1x384xf32>
    %66 = arith.addf %63, %65 : vector<1x384xf32>
    %67 = arith.addf %57, %66 : vector<1x384xf32>
    %c70 = arith.constant 70 : index
    %68 = memref.load %arg2[%c70] : memref<98xf32, #tpu.memory_space<smem>>
    %c71 = arith.constant 71 : index
    %69 = memref.load %arg2[%c71] : memref<98xf32, #tpu.memory_space<smem>>
    %c355_i32 = arith.constant 355 : i32
    %70 = tpu.dynamic_rotate %16 by %c355_i32 dim 1 : vector<1x384xf32>, i32 -> vector<1x384xf32>
    %c355_i32_21 = arith.constant 355 : i32
    %71 = tpu.dynamic_rotate %17 by %c355_i32_21 dim 1 : vector<1x384xf32>, i32 -> vector<1x384xf32>
    %72 = vector.broadcast %68 : f32 to vector<1x384xf32>
    %73 = arith.mulf %70, %72 : vector<1x384xf32>
    %74 = vector.broadcast %69 : f32 to vector<1x384xf32>
    %75 = arith.mulf %71, %74 : vector<1x384xf32>
    %76 = arith.addf %73, %75 : vector<1x384xf32>
    %77 = arith.addf %67, %76 : vector<1x384xf32>
    %c84 = arith.constant 84 : index
    %78 = memref.load %arg2[%c84] : memref<98xf32, #tpu.memory_space<smem>>
    %c85 = arith.constant 85 : index
    %79 = memref.load %arg2[%c85] : memref<98xf32, #tpu.memory_space<smem>>
    %c339_i32 = arith.constant 339 : i32
    %80 = tpu.dynamic_rotate %16 by %c339_i32 dim 1 : vector<1x384xf32>, i32 -> vector<1x384xf32>
    %c339_i32_22 = arith.constant 339 : i32
    %81 = tpu.dynamic_rotate %17 by %c339_i32_22 dim 1 : vector<1x384xf32>, i32 -> vector<1x384xf32>
    %82 = vector.broadcast %78 : f32 to vector<1x384xf32>
    %83 = arith.mulf %80, %82 : vector<1x384xf32>
    %84 = vector.broadcast %79 : f32 to vector<1x384xf32>
    %85 = arith.mulf %81, %84 : vector<1x384xf32>
    %86 = arith.addf %83, %85 : vector<1x384xf32>
    %87 = arith.addf %77, %86 : vector<1x384xf32>
    %88 = vector.extract_strided_slice %87 {offsets = [0, 0], sizes = [1, 256], strides = [1, 1]} : vector<1x384xf32> to vector<1x256xf32>
    %89 = arith.mulf %88, %1 : vector<1x256xf32>
    %90 = arith.addf %18, %89 : vector<1x256xf32>
    %c2_23 = arith.constant 2 : index
    %91 = memref.load %arg2[%c2_23] : memref<98xf32, #tpu.memory_space<smem>>
    %c3_24 = arith.constant 3 : index
    %92 = memref.load %arg2[%c3_24] : memref<98xf32, #tpu.memory_space<smem>>
    %c50_i32 = arith.constant 50 : i32
    %93 = tpu.dynamic_rotate %16 by %c50_i32 dim 1 : vector<1x384xf32>, i32 -> vector<1x384xf32>
    %c50_i32_25 = arith.constant 50 : i32
    %94 = tpu.dynamic_rotate %17 by %c50_i32_25 dim 1 : vector<1x384xf32>, i32 -> vector<1x384xf32>
    %95 = vector.broadcast %91 : f32 to vector<1x384xf32>
    %96 = arith.mulf %93, %95 : vector<1x384xf32>
    %97 = vector.broadcast %92 : f32 to vector<1x384xf32>
    %98 = arith.mulf %94, %97 : vector<1x384xf32>
    %99 = arith.addf %96, %98 : vector<1x384xf32>
    %c16 = arith.constant 16 : index
    %100 = memref.load %arg2[%c16] : memref<98xf32, #tpu.memory_space<smem>>
    %c17 = arith.constant 17 : index
    %101 = memref.load %arg2[%c17] : memref<98xf32, #tpu.memory_space<smem>>
    %c34_i32 = arith.constant 34 : i32
    %102 = tpu.dynamic_rotate %16 by %c34_i32 dim 1 : vector<1x384xf32>, i32 -> vector<1x384xf32>
    %c34_i32_26 = arith.constant 34 : i32
    %103 = tpu.dynamic_rotate %17 by %c34_i32_26 dim 1 : vector<1x384xf32>, i32 -> vector<1x384xf32>
    %104 = vector.broadcast %100 : f32 to vector<1x384xf32>
    %105 = arith.mulf %102, %104 : vector<1x384xf32>
    %106 = vector.broadcast %101 : f32 to vector<1x384xf32>
    %107 = arith.mulf %103, %106 : vector<1x384xf32>
    %108 = arith.addf %105, %107 : vector<1x384xf32>
    %109 = arith.addf %99, %108 : vector<1x384xf32>
    %c30 = arith.constant 30 : index
    %110 = memref.load %arg2[%c30] : memref<98xf32, #tpu.memory_space<smem>>
    %c31 = arith.constant 31 : index
    %111 = memref.load %arg2[%c31] : memref<98xf32, #tpu.memory_space<smem>>
    %c18_i32 = arith.constant 18 : i32
    %112 = tpu.dynamic_rotate %16 by %c18_i32 dim 1 : vector<1x384xf32>, i32 -> vector<1x384xf32>
    %c18_i32_27 = arith.constant 18 : i32
    %113 = tpu.dynamic_rotate %17 by %c18_i32_27 dim 1 : vector<1x384xf32>, i32 -> vector<1x384xf32>
    %114 = vector.broadcast %110 : f32 to vector<1x384xf32>
    %115 = arith.mulf %112, %114 : vector<1x384xf32>
    %116 = vector.broadcast %111 : f32 to vector<1x384xf32>
    %117 = arith.mulf %113, %116 : vector<1x384xf32>
    %118 = arith.addf %115, %117 : vector<1x384xf32>
    %119 = arith.addf %109, %118 : vector<1x384xf32>
    %c44 = arith.constant 44 : index
    %120 = memref.load %arg2[%c44] : memref<98xf32, #tpu.memory_space<smem>>
    %c45 = arith.constant 45 : index
    %121 = memref.load %arg2[%c45] : memref<98xf32, #tpu.memory_space<smem>>
    %c2_i32 = arith.constant 2 : i32
    %122 = tpu.dynamic_rotate %16 by %c2_i32 dim 1 : vector<1x384xf32>, i32 -> vector<1x384xf32>
    %c2_i32_28 = arith.constant 2 : i32
    %123 = tpu.dynamic_rotate %17 by %c2_i32_28 dim 1 : vector<1x384xf32>, i32 -> vector<1x384xf32>
    %124 = vector.broadcast %120 : f32 to vector<1x384xf32>
    %125 = arith.mulf %122, %124 : vector<1x384xf32>
    %126 = vector.broadcast %121 : f32 to vector<1x384xf32>
    %127 = arith.mulf %123, %126 : vector<1x384xf32>
    %128 = arith.addf %125, %127 : vector<1x384xf32>
    %129 = arith.addf %119, %128 : vector<1x384xf32>
    %c58 = arith.constant 58 : index
    %130 = memref.load %arg2[%c58] : memref<98xf32, #tpu.memory_space<smem>>
    %c59 = arith.constant 59 : index
    %131 = memref.load %arg2[%c59] : memref<98xf32, #tpu.memory_space<smem>>
    %c370_i32 = arith.constant 370 : i32
    %132 = tpu.dynamic_rotate %16 by %c370_i32 dim 1 : vector<1x384xf32>, i32 -> vector<1x384xf32>
    %c370_i32_29 = arith.constant 370 : i32
    %133 = tpu.dynamic_rotate %17 by %c370_i32_29 dim 1 : vector<1x384xf32>, i32 -> vector<1x384xf32>
    %134 = vector.broadcast %130 : f32 to vector<1x384xf32>
    %135 = arith.mulf %132, %134 : vector<1x384xf32>
    %136 = vector.broadcast %131 : f32 to vector<1x384xf32>
    %137 = arith.mulf %133, %136 : vector<1x384xf32>
    %138 = arith.addf %135, %137 : vector<1x384xf32>
    %139 = arith.addf %129, %138 : vector<1x384xf32>
    %c72 = arith.constant 72 : index
    %140 = memref.load %arg2[%c72] : memref<98xf32, #tpu.memory_space<smem>>
    %c73 = arith.constant 73 : index
    %141 = memref.load %arg2[%c73] : memref<98xf32, #tpu.memory_space<smem>>
    %c354_i32 = arith.constant 354 : i32
    %142 = tpu.dynamic_rotate %16 by %c354_i32 dim 1 : vector<1x384xf32>, i32 -> vector<1x384xf32>
    %c354_i32_30 = arith.constant 354 : i32
    %143 = tpu.dynamic_rotate %17 by %c354_i32_30 dim 1 : vector<1x384xf32>, i32 -> vector<1x384xf32>
    %144 = vector.broadcast %140 : f32 to vector<1x384xf32>
    %145 = arith.mulf %142, %144 : vector<1x384xf32>
    %146 = vector.broadcast %141 : f32 to vector<1x384xf32>
    %147 = arith.mulf %143, %146 : vector<1x384xf32>
    %148 = arith.addf %145, %147 : vector<1x384xf32>
    %149 = arith.addf %139, %148 : vector<1x384xf32>
    %c86 = arith.constant 86 : index
    %150 = memref.load %arg2[%c86] : memref<98xf32, #tpu.memory_space<smem>>
    %c87 = arith.constant 87 : index
    %151 = memref.load %arg2[%c87] : memref<98xf32, #tpu.memory_space<smem>>
    %c338_i32 = arith.constant 338 : i32
    %152 = tpu.dynamic_rotate %16 by %c338_i32 dim 1 : vector<1x384xf32>, i32 -> vector<1x384xf32>
    %c338_i32_31 = arith.constant 338 : i32
    %153 = tpu.dynamic_rotate %17 by %c338_i32_31 dim 1 : vector<1x384xf32>, i32 -> vector<1x384xf32>
    %154 = vector.broadcast %150 : f32 to vector<1x384xf32>
    %155 = arith.mulf %152, %154 : vector<1x384xf32>
    %156 = vector.broadcast %151 : f32 to vector<1x384xf32>
    %157 = arith.mulf %153, %156 : vector<1x384xf32>
    %158 = arith.addf %155, %157 : vector<1x384xf32>
    %159 = arith.addf %149, %158 : vector<1x384xf32>
    %160 = vector.extract_strided_slice %159 {offsets = [0, 0], sizes = [1, 256], strides = [1, 1]} : vector<1x384xf32> to vector<1x256xf32>
    %161 = arith.mulf %160, %2 : vector<1x256xf32>
    %162 = arith.addf %90, %161 : vector<1x256xf32>
    %c4_32 = arith.constant 4 : index
    %163 = memref.load %arg2[%c4_32] : memref<98xf32, #tpu.memory_space<smem>>
    %c5_33 = arith.constant 5 : index
    %164 = memref.load %arg2[%c5_33] : memref<98xf32, #tpu.memory_space<smem>>
    %c49_i32 = arith.constant 49 : i32
    %165 = tpu.dynamic_rotate %16 by %c49_i32 dim 1 : vector<1x384xf32>, i32 -> vector<1x384xf32>
    %c49_i32_34 = arith.constant 49 : i32
    %166 = tpu.dynamic_rotate %17 by %c49_i32_34 dim 1 : vector<1x384xf32>, i32 -> vector<1x384xf32>
    %167 = vector.broadcast %163 : f32 to vector<1x384xf32>
    %168 = arith.mulf %165, %167 : vector<1x384xf32>
    %169 = vector.broadcast %164 : f32 to vector<1x384xf32>
    %170 = arith.mulf %166, %169 : vector<1x384xf32>
    %171 = arith.addf %168, %170 : vector<1x384xf32>
    %c18 = arith.constant 18 : index
    %172 = memref.load %arg2[%c18] : memref<98xf32, #tpu.memory_space<smem>>
    %c19 = arith.constant 19 : index
    %173 = memref.load %arg2[%c19] : memref<98xf32, #tpu.memory_space<smem>>
    %c33_i32 = arith.constant 33 : i32
    %174 = tpu.dynamic_rotate %16 by %c33_i32 dim 1 : vector<1x384xf32>, i32 -> vector<1x384xf32>
    %c33_i32_35 = arith.constant 33 : i32
    %175 = tpu.dynamic_rotate %17 by %c33_i32_35 dim 1 : vector<1x384xf32>, i32 -> vector<1x384xf32>
    %176 = vector.broadcast %172 : f32 to vector<1x384xf32>
    %177 = arith.mulf %174, %176 : vector<1x384xf32>
    %178 = vector.broadcast %173 : f32 to vector<1x384xf32>
    %179 = arith.mulf %175, %178 : vector<1x384xf32>
    %180 = arith.addf %177, %179 : vector<1x384xf32>
    %181 = arith.addf %171, %180 : vector<1x384xf32>
    %c32 = arith.constant 32 : index
    %182 = memref.load %arg2[%c32] : memref<98xf32, #tpu.memory_space<smem>>
    %c33 = arith.constant 33 : index
    %183 = memref.load %arg2[%c33] : memref<98xf32, #tpu.memory_space<smem>>
    %c17_i32 = arith.constant 17 : i32
    %184 = tpu.dynamic_rotate %16 by %c17_i32 dim 1 : vector<1x384xf32>, i32 -> vector<1x384xf32>
    %c17_i32_36 = arith.constant 17 : i32
    %185 = tpu.dynamic_rotate %17 by %c17_i32_36 dim 1 : vector<1x384xf32>, i32 -> vector<1x384xf32>
    %186 = vector.broadcast %182 : f32 to vector<1x384xf32>
    %187 = arith.mulf %184, %186 : vector<1x384xf32>
    %188 = vector.broadcast %183 : f32 to vector<1x384xf32>
    %189 = arith.mulf %185, %188 : vector<1x384xf32>
    %190 = arith.addf %187, %189 : vector<1x384xf32>
    %191 = arith.addf %181, %190 : vector<1x384xf32>
    %c46 = arith.constant 46 : index
    %192 = memref.load %arg2[%c46] : memref<98xf32, #tpu.memory_space<smem>>
    %c47 = arith.constant 47 : index
    %193 = memref.load %arg2[%c47] : memref<98xf32, #tpu.memory_space<smem>>
    %c1_i32 = arith.constant 1 : i32
    %194 = tpu.dynamic_rotate %16 by %c1_i32 dim 1 : vector<1x384xf32>, i32 -> vector<1x384xf32>
    %c1_i32_37 = arith.constant 1 : i32
    %195 = tpu.dynamic_rotate %17 by %c1_i32_37 dim 1 : vector<1x384xf32>, i32 -> vector<1x384xf32>
    %196 = vector.broadcast %192 : f32 to vector<1x384xf32>
    %197 = arith.mulf %194, %196 : vector<1x384xf32>
    %198 = vector.broadcast %193 : f32 to vector<1x384xf32>
    %199 = arith.mulf %195, %198 : vector<1x384xf32>
    %200 = arith.addf %197, %199 : vector<1x384xf32>
    %201 = arith.addf %191, %200 : vector<1x384xf32>
    %c60 = arith.constant 60 : index
    %202 = memref.load %arg2[%c60] : memref<98xf32, #tpu.memory_space<smem>>
    %c61 = arith.constant 61 : index
    %203 = memref.load %arg2[%c61] : memref<98xf32, #tpu.memory_space<smem>>
    %c369_i32 = arith.constant 369 : i32
    %204 = tpu.dynamic_rotate %16 by %c369_i32 dim 1 : vector<1x384xf32>, i32 -> vector<1x384xf32>
    %c369_i32_38 = arith.constant 369 : i32
    %205 = tpu.dynamic_rotate %17 by %c369_i32_38 dim 1 : vector<1x384xf32>, i32 -> vector<1x384xf32>
    %206 = vector.broadcast %202 : f32 to vector<1x384xf32>
    %207 = arith.mulf %204, %206 : vector<1x384xf32>
    %208 = vector.broadcast %203 : f32 to vector<1x384xf32>
    %209 = arith.mulf %205, %208 : vector<1x384xf32>
    %210 = arith.addf %207, %209 : vector<1x384xf32>
    %211 = arith.addf %201, %210 : vector<1x384xf32>
    %c74 = arith.constant 74 : index
    %212 = memref.load %arg2[%c74] : memref<98xf32, #tpu.memory_space<smem>>
    %c75 = arith.constant 75 : index
    %213 = memref.load %arg2[%c75] : memref<98xf32, #tpu.memory_space<smem>>
    %c353_i32 = arith.constant 353 : i32
    %214 = tpu.dynamic_rotate %16 by %c353_i32 dim 1 : vector<1x384xf32>, i32 -> vector<1x384xf32>
    %c353_i32_39 = arith.constant 353 : i32
    %215 = tpu.dynamic_rotate %17 by %c353_i32_39 dim 1 : vector<1x384xf32>, i32 -> vector<1x384xf32>
    %216 = vector.broadcast %212 : f32 to vector<1x384xf32>
    %217 = arith.mulf %214, %216 : vector<1x384xf32>
    %218 = vector.broadcast %213 : f32 to vector<1x384xf32>
    %219 = arith.mulf %215, %218 : vector<1x384xf32>
    %220 = arith.addf %217, %219 : vector<1x384xf32>
    %221 = arith.addf %211, %220 : vector<1x384xf32>
    %c88 = arith.constant 88 : index
    %222 = memref.load %arg2[%c88] : memref<98xf32, #tpu.memory_space<smem>>
    %c89 = arith.constant 89 : index
    %223 = memref.load %arg2[%c89] : memref<98xf32, #tpu.memory_space<smem>>
    %c337_i32 = arith.constant 337 : i32
    %224 = tpu.dynamic_rotate %16 by %c337_i32 dim 1 : vector<1x384xf32>, i32 -> vector<1x384xf32>
    %c337_i32_40 = arith.constant 337 : i32
    %225 = tpu.dynamic_rotate %17 by %c337_i32_40 dim 1 : vector<1x384xf32>, i32 -> vector<1x384xf32>
    %226 = vector.broadcast %222 : f32 to vector<1x384xf32>
    %227 = arith.mulf %224, %226 : vector<1x384xf32>
    %228 = vector.broadcast %223 : f32 to vector<1x384xf32>
    %229 = arith.mulf %225, %228 : vector<1x384xf32>
    %230 = arith.addf %227, %229 : vector<1x384xf32>
    %231 = arith.addf %221, %230 : vector<1x384xf32>
    %232 = vector.extract_strided_slice %231 {offsets = [0, 0], sizes = [1, 256], strides = [1, 1]} : vector<1x384xf32> to vector<1x256xf32>
    %233 = arith.mulf %232, %3 : vector<1x256xf32>
    %234 = arith.addf %162, %233 : vector<1x256xf32>
    %c6_41 = arith.constant 6 : index
    %235 = memref.load %arg2[%c6_41] : memref<98xf32, #tpu.memory_space<smem>>
    %c7 = arith.constant 7 : index
    %236 = memref.load %arg2[%c7] : memref<98xf32, #tpu.memory_space<smem>>
    %c48_i32 = arith.constant 48 : i32
    %237 = tpu.dynamic_rotate %16 by %c48_i32 dim 1 : vector<1x384xf32>, i32 -> vector<1x384xf32>
    %c48_i32_42 = arith.constant 48 : i32
    %238 = tpu.dynamic_rotate %17 by %c48_i32_42 dim 1 : vector<1x384xf32>, i32 -> vector<1x384xf32>
    %239 = vector.broadcast %235 : f32 to vector<1x384xf32>
    %240 = arith.mulf %237, %239 : vector<1x384xf32>
    %241 = vector.broadcast %236 : f32 to vector<1x384xf32>
    %242 = arith.mulf %238, %241 : vector<1x384xf32>
    %243 = arith.addf %240, %242 : vector<1x384xf32>
    %c20 = arith.constant 20 : index
    %244 = memref.load %arg2[%c20] : memref<98xf32, #tpu.memory_space<smem>>
    %c21 = arith.constant 21 : index
    %245 = memref.load %arg2[%c21] : memref<98xf32, #tpu.memory_space<smem>>
    %c32_i32 = arith.constant 32 : i32
    %246 = tpu.dynamic_rotate %16 by %c32_i32 dim 1 : vector<1x384xf32>, i32 -> vector<1x384xf32>
    %c32_i32_43 = arith.constant 32 : i32
    %247 = tpu.dynamic_rotate %17 by %c32_i32_43 dim 1 : vector<1x384xf32>, i32 -> vector<1x384xf32>
    %248 = vector.broadcast %244 : f32 to vector<1x384xf32>
    %249 = arith.mulf %246, %248 : vector<1x384xf32>
    %250 = vector.broadcast %245 : f32 to vector<1x384xf32>
    %251 = arith.mulf %247, %250 : vector<1x384xf32>
    %252 = arith.addf %249, %251 : vector<1x384xf32>
    %253 = arith.addf %243, %252 : vector<1x384xf32>
    %c34 = arith.constant 34 : index
    %254 = memref.load %arg2[%c34] : memref<98xf32, #tpu.memory_space<smem>>
    %c35 = arith.constant 35 : index
    %255 = memref.load %arg2[%c35] : memref<98xf32, #tpu.memory_space<smem>>
    %c16_i32 = arith.constant 16 : i32
    %256 = tpu.dynamic_rotate %16 by %c16_i32 dim 1 : vector<1x384xf32>, i32 -> vector<1x384xf32>
    %c16_i32_44 = arith.constant 16 : i32
    %257 = tpu.dynamic_rotate %17 by %c16_i32_44 dim 1 : vector<1x384xf32>, i32 -> vector<1x384xf32>
    %258 = vector.broadcast %254 : f32 to vector<1x384xf32>
    %259 = arith.mulf %256, %258 : vector<1x384xf32>
    %260 = vector.broadcast %255 : f32 to vector<1x384xf32>
    %261 = arith.mulf %257, %260 : vector<1x384xf32>
    %262 = arith.addf %259, %261 : vector<1x384xf32>
    %263 = arith.addf %253, %262 : vector<1x384xf32>
    %c48 = arith.constant 48 : index
    %264 = memref.load %arg2[%c48] : memref<98xf32, #tpu.memory_space<smem>>
    %c49 = arith.constant 49 : index
    %265 = memref.load %arg2[%c49] : memref<98xf32, #tpu.memory_space<smem>>
    %266 = vector.broadcast %264 : f32 to vector<1x384xf32>
    %267 = arith.mulf %16, %266 : vector<1x384xf32>
    %268 = vector.broadcast %265 : f32 to vector<1x384xf32>
    %269 = arith.mulf %17, %268 : vector<1x384xf32>
    %270 = arith.addf %267, %269 : vector<1x384xf32>
    %271 = arith.addf %263, %270 : vector<1x384xf32>
    %c62 = arith.constant 62 : index
    %272 = memref.load %arg2[%c62] : memref<98xf32, #tpu.memory_space<smem>>
    %c63 = arith.constant 63 : index
    %273 = memref.load %arg2[%c63] : memref<98xf32, #tpu.memory_space<smem>>
    %c368_i32 = arith.constant 368 : i32
    %274 = tpu.dynamic_rotate %16 by %c368_i32 dim 1 : vector<1x384xf32>, i32 -> vector<1x384xf32>
    %c368_i32_45 = arith.constant 368 : i32
    %275 = tpu.dynamic_rotate %17 by %c368_i32_45 dim 1 : vector<1x384xf32>, i32 -> vector<1x384xf32>
    %276 = vector.broadcast %272 : f32 to vector<1x384xf32>
    %277 = arith.mulf %274, %276 : vector<1x384xf32>
    %278 = vector.broadcast %273 : f32 to vector<1x384xf32>
    %279 = arith.mulf %275, %278 : vector<1x384xf32>
    %280 = arith.addf %277, %279 : vector<1x384xf32>
    %281 = arith.addf %271, %280 : vector<1x384xf32>
    %c76 = arith.constant 76 : index
    %282 = memref.load %arg2[%c76] : memref<98xf32, #tpu.memory_space<smem>>
    %c77 = arith.constant 77 : index
    %283 = memref.load %arg2[%c77] : memref<98xf32, #tpu.memory_space<smem>>
    %c352_i32 = arith.constant 352 : i32
    %284 = tpu.dynamic_rotate %16 by %c352_i32 dim 1 : vector<1x384xf32>, i32 -> vector<1x384xf32>
    %c352_i32_46 = arith.constant 352 : i32
    %285 = tpu.dynamic_rotate %17 by %c352_i32_46 dim 1 : vector<1x384xf32>, i32 -> vector<1x384xf32>
    %286 = vector.broadcast %282 : f32 to vector<1x384xf32>
    %287 = arith.mulf %284, %286 : vector<1x384xf32>
    %288 = vector.broadcast %283 : f32 to vector<1x384xf32>
    %289 = arith.mulf %285, %288 : vector<1x384xf32>
    %290 = arith.addf %287, %289 : vector<1x384xf32>
    %291 = arith.addf %281, %290 : vector<1x384xf32>
    %c90 = arith.constant 90 : index
    %292 = memref.load %arg2[%c90] : memref<98xf32, #tpu.memory_space<smem>>
    %c91 = arith.constant 91 : index
    %293 = memref.load %arg2[%c91] : memref<98xf32, #tpu.memory_space<smem>>
    %c336_i32 = arith.constant 336 : i32
    %294 = tpu.dynamic_rotate %16 by %c336_i32 dim 1 : vector<1x384xf32>, i32 -> vector<1x384xf32>
    %c336_i32_47 = arith.constant 336 : i32
    %295 = tpu.dynamic_rotate %17 by %c336_i32_47 dim 1 : vector<1x384xf32>, i32 -> vector<1x384xf32>
    %296 = vector.broadcast %292 : f32 to vector<1x384xf32>
    %297 = arith.mulf %294, %296 : vector<1x384xf32>
    %298 = vector.broadcast %293 : f32 to vector<1x384xf32>
    %299 = arith.mulf %295, %298 : vector<1x384xf32>
    %300 = arith.addf %297, %299 : vector<1x384xf32>
    %301 = arith.addf %291, %300 : vector<1x384xf32>
    %302 = vector.extract_strided_slice %301 {offsets = [0, 0], sizes = [1, 256], strides = [1, 1]} : vector<1x384xf32> to vector<1x256xf32>
    %303 = arith.mulf %302, %4 : vector<1x256xf32>
    %304 = arith.addf %234, %303 : vector<1x256xf32>
    %c8 = arith.constant 8 : index
    %305 = memref.load %arg2[%c8] : memref<98xf32, #tpu.memory_space<smem>>
    %c9 = arith.constant 9 : index
    %306 = memref.load %arg2[%c9] : memref<98xf32, #tpu.memory_space<smem>>
    %c47_i32 = arith.constant 47 : i32
    %307 = tpu.dynamic_rotate %16 by %c47_i32 dim 1 : vector<1x384xf32>, i32 -> vector<1x384xf32>
    %c47_i32_48 = arith.constant 47 : i32
    %308 = tpu.dynamic_rotate %17 by %c47_i32_48 dim 1 : vector<1x384xf32>, i32 -> vector<1x384xf32>
    %309 = vector.broadcast %305 : f32 to vector<1x384xf32>
    %310 = arith.mulf %307, %309 : vector<1x384xf32>
    %311 = vector.broadcast %306 : f32 to vector<1x384xf32>
    %312 = arith.mulf %308, %311 : vector<1x384xf32>
    %313 = arith.addf %310, %312 : vector<1x384xf32>
    %c22 = arith.constant 22 : index
    %314 = memref.load %arg2[%c22] : memref<98xf32, #tpu.memory_space<smem>>
    %c23 = arith.constant 23 : index
    %315 = memref.load %arg2[%c23] : memref<98xf32, #tpu.memory_space<smem>>
    %c31_i32 = arith.constant 31 : i32
    %316 = tpu.dynamic_rotate %16 by %c31_i32 dim 1 : vector<1x384xf32>, i32 -> vector<1x384xf32>
    %c31_i32_49 = arith.constant 31 : i32
    %317 = tpu.dynamic_rotate %17 by %c31_i32_49 dim 1 : vector<1x384xf32>, i32 -> vector<1x384xf32>
    %318 = vector.broadcast %314 : f32 to vector<1x384xf32>
    %319 = arith.mulf %316, %318 : vector<1x384xf32>
    %320 = vector.broadcast %315 : f32 to vector<1x384xf32>
    %321 = arith.mulf %317, %320 : vector<1x384xf32>
    %322 = arith.addf %319, %321 : vector<1x384xf32>
    %323 = arith.addf %313, %322 : vector<1x384xf32>
    %c36 = arith.constant 36 : index
    %324 = memref.load %arg2[%c36] : memref<98xf32, #tpu.memory_space<smem>>
    %c37 = arith.constant 37 : index
    %325 = memref.load %arg2[%c37] : memref<98xf32, #tpu.memory_space<smem>>
    %c15_i32 = arith.constant 15 : i32
    %326 = tpu.dynamic_rotate %16 by %c15_i32 dim 1 : vector<1x384xf32>, i32 -> vector<1x384xf32>
    %c15_i32_50 = arith.constant 15 : i32
    %327 = tpu.dynamic_rotate %17 by %c15_i32_50 dim 1 : vector<1x384xf32>, i32 -> vector<1x384xf32>
    %328 = vector.broadcast %324 : f32 to vector<1x384xf32>
    %329 = arith.mulf %326, %328 : vector<1x384xf32>
    %330 = vector.broadcast %325 : f32 to vector<1x384xf32>
    %331 = arith.mulf %327, %330 : vector<1x384xf32>
    %332 = arith.addf %329, %331 : vector<1x384xf32>
    %333 = arith.addf %323, %332 : vector<1x384xf32>
    %c50 = arith.constant 50 : index
    %334 = memref.load %arg2[%c50] : memref<98xf32, #tpu.memory_space<smem>>
    %c51 = arith.constant 51 : index
    %335 = memref.load %arg2[%c51] : memref<98xf32, #tpu.memory_space<smem>>
    %c383_i32 = arith.constant 383 : i32
    %336 = tpu.dynamic_rotate %16 by %c383_i32 dim 1 : vector<1x384xf32>, i32 -> vector<1x384xf32>
    %c383_i32_51 = arith.constant 383 : i32
    %337 = tpu.dynamic_rotate %17 by %c383_i32_51 dim 1 : vector<1x384xf32>, i32 -> vector<1x384xf32>
    %338 = vector.broadcast %334 : f32 to vector<1x384xf32>
    %339 = arith.mulf %336, %338 : vector<1x384xf32>
    %340 = vector.broadcast %335 : f32 to vector<1x384xf32>
    %341 = arith.mulf %337, %340 : vector<1x384xf32>
    %342 = arith.addf %339, %341 : vector<1x384xf32>
    %343 = arith.addf %333, %342 : vector<1x384xf32>
    %c64 = arith.constant 64 : index
    %344 = memref.load %arg2[%c64] : memref<98xf32, #tpu.memory_space<smem>>
    %c65 = arith.constant 65 : index
    %345 = memref.load %arg2[%c65] : memref<98xf32, #tpu.memory_space<smem>>
    %c367_i32 = arith.constant 367 : i32
    %346 = tpu.dynamic_rotate %16 by %c367_i32 dim 1 : vector<1x384xf32>, i32 -> vector<1x384xf32>
    %c367_i32_52 = arith.constant 367 : i32
    %347 = tpu.dynamic_rotate %17 by %c367_i32_52 dim 1 : vector<1x384xf32>, i32 -> vector<1x384xf32>
    %348 = vector.broadcast %344 : f32 to vector<1x384xf32>
    %349 = arith.mulf %346, %348 : vector<1x384xf32>
    %350 = vector.broadcast %345 : f32 to vector<1x384xf32>
    %351 = arith.mulf %347, %350 : vector<1x384xf32>
    %352 = arith.addf %349, %351 : vector<1x384xf32>
    %353 = arith.addf %343, %352 : vector<1x384xf32>
    %c78 = arith.constant 78 : index
    %354 = memref.load %arg2[%c78] : memref<98xf32, #tpu.memory_space<smem>>
    %c79 = arith.constant 79 : index
    %355 = memref.load %arg2[%c79] : memref<98xf32, #tpu.memory_space<smem>>
    %c351_i32 = arith.constant 351 : i32
    %356 = tpu.dynamic_rotate %16 by %c351_i32 dim 1 : vector<1x384xf32>, i32 -> vector<1x384xf32>
    %c351_i32_53 = arith.constant 351 : i32
    %357 = tpu.dynamic_rotate %17 by %c351_i32_53 dim 1 : vector<1x384xf32>, i32 -> vector<1x384xf32>
    %358 = vector.broadcast %354 : f32 to vector<1x384xf32>
    %359 = arith.mulf %356, %358 : vector<1x384xf32>
    %360 = vector.broadcast %355 : f32 to vector<1x384xf32>
    %361 = arith.mulf %357, %360 : vector<1x384xf32>
    %362 = arith.addf %359, %361 : vector<1x384xf32>
    %363 = arith.addf %353, %362 : vector<1x384xf32>
    %c92 = arith.constant 92 : index
    %364 = memref.load %arg2[%c92] : memref<98xf32, #tpu.memory_space<smem>>
    %c93 = arith.constant 93 : index
    %365 = memref.load %arg2[%c93] : memref<98xf32, #tpu.memory_space<smem>>
    %c335_i32 = arith.constant 335 : i32
    %366 = tpu.dynamic_rotate %16 by %c335_i32 dim 1 : vector<1x384xf32>, i32 -> vector<1x384xf32>
    %c335_i32_54 = arith.constant 335 : i32
    %367 = tpu.dynamic_rotate %17 by %c335_i32_54 dim 1 : vector<1x384xf32>, i32 -> vector<1x384xf32>
    %368 = vector.broadcast %364 : f32 to vector<1x384xf32>
    %369 = arith.mulf %366, %368 : vector<1x384xf32>
    %370 = vector.broadcast %365 : f32 to vector<1x384xf32>
    %371 = arith.mulf %367, %370 : vector<1x384xf32>
    %372 = arith.addf %369, %371 : vector<1x384xf32>
    %373 = arith.addf %363, %372 : vector<1x384xf32>
    %374 = vector.extract_strided_slice %373 {offsets = [0, 0], sizes = [1, 256], strides = [1, 1]} : vector<1x384xf32> to vector<1x256xf32>
    %375 = arith.mulf %374, %5 : vector<1x256xf32>
    %376 = arith.addf %304, %375 : vector<1x256xf32>
    %c10 = arith.constant 10 : index
    %377 = memref.load %arg2[%c10] : memref<98xf32, #tpu.memory_space<smem>>
    %c11 = arith.constant 11 : index
    %378 = memref.load %arg2[%c11] : memref<98xf32, #tpu.memory_space<smem>>
    %c46_i32 = arith.constant 46 : i32
    %379 = tpu.dynamic_rotate %16 by %c46_i32 dim 1 : vector<1x384xf32>, i32 -> vector<1x384xf32>
    %c46_i32_55 = arith.constant 46 : i32
    %380 = tpu.dynamic_rotate %17 by %c46_i32_55 dim 1 : vector<1x384xf32>, i32 -> vector<1x384xf32>
    %381 = vector.broadcast %377 : f32 to vector<1x384xf32>
    %382 = arith.mulf %379, %381 : vector<1x384xf32>
    %383 = vector.broadcast %378 : f32 to vector<1x384xf32>
    %384 = arith.mulf %380, %383 : vector<1x384xf32>
    %385 = arith.addf %382, %384 : vector<1x384xf32>
    %c24 = arith.constant 24 : index
    %386 = memref.load %arg2[%c24] : memref<98xf32, #tpu.memory_space<smem>>
    %c25 = arith.constant 25 : index
    %387 = memref.load %arg2[%c25] : memref<98xf32, #tpu.memory_space<smem>>
    %c30_i32 = arith.constant 30 : i32
    %388 = tpu.dynamic_rotate %16 by %c30_i32 dim 1 : vector<1x384xf32>, i32 -> vector<1x384xf32>
    %c30_i32_56 = arith.constant 30 : i32
    %389 = tpu.dynamic_rotate %17 by %c30_i32_56 dim 1 : vector<1x384xf32>, i32 -> vector<1x384xf32>
    %390 = vector.broadcast %386 : f32 to vector<1x384xf32>
    %391 = arith.mulf %388, %390 : vector<1x384xf32>
    %392 = vector.broadcast %387 : f32 to vector<1x384xf32>
    %393 = arith.mulf %389, %392 : vector<1x384xf32>
    %394 = arith.addf %391, %393 : vector<1x384xf32>
    %395 = arith.addf %385, %394 : vector<1x384xf32>
    %c38 = arith.constant 38 : index
    %396 = memref.load %arg2[%c38] : memref<98xf32, #tpu.memory_space<smem>>
    %c39 = arith.constant 39 : index
    %397 = memref.load %arg2[%c39] : memref<98xf32, #tpu.memory_space<smem>>
    %c14_i32 = arith.constant 14 : i32
    %398 = tpu.dynamic_rotate %16 by %c14_i32 dim 1 : vector<1x384xf32>, i32 -> vector<1x384xf32>
    %c14_i32_57 = arith.constant 14 : i32
    %399 = tpu.dynamic_rotate %17 by %c14_i32_57 dim 1 : vector<1x384xf32>, i32 -> vector<1x384xf32>
    %400 = vector.broadcast %396 : f32 to vector<1x384xf32>
    %401 = arith.mulf %398, %400 : vector<1x384xf32>
    %402 = vector.broadcast %397 : f32 to vector<1x384xf32>
    %403 = arith.mulf %399, %402 : vector<1x384xf32>
    %404 = arith.addf %401, %403 : vector<1x384xf32>
    %405 = arith.addf %395, %404 : vector<1x384xf32>
    %c52 = arith.constant 52 : index
    %406 = memref.load %arg2[%c52] : memref<98xf32, #tpu.memory_space<smem>>
    %c53 = arith.constant 53 : index
    %407 = memref.load %arg2[%c53] : memref<98xf32, #tpu.memory_space<smem>>
    %c382_i32 = arith.constant 382 : i32
    %408 = tpu.dynamic_rotate %16 by %c382_i32 dim 1 : vector<1x384xf32>, i32 -> vector<1x384xf32>
    %c382_i32_58 = arith.constant 382 : i32
    %409 = tpu.dynamic_rotate %17 by %c382_i32_58 dim 1 : vector<1x384xf32>, i32 -> vector<1x384xf32>
    %410 = vector.broadcast %406 : f32 to vector<1x384xf32>
    %411 = arith.mulf %408, %410 : vector<1x384xf32>
    %412 = vector.broadcast %407 : f32 to vector<1x384xf32>
    %413 = arith.mulf %409, %412 : vector<1x384xf32>
    %414 = arith.addf %411, %413 : vector<1x384xf32>
    %415 = arith.addf %405, %414 : vector<1x384xf32>
    %c66 = arith.constant 66 : index
    %416 = memref.load %arg2[%c66] : memref<98xf32, #tpu.memory_space<smem>>
    %c67 = arith.constant 67 : index
    %417 = memref.load %arg2[%c67] : memref<98xf32, #tpu.memory_space<smem>>
    %c366_i32 = arith.constant 366 : i32
    %418 = tpu.dynamic_rotate %16 by %c366_i32 dim 1 : vector<1x384xf32>, i32 -> vector<1x384xf32>
    %c366_i32_59 = arith.constant 366 : i32
    %419 = tpu.dynamic_rotate %17 by %c366_i32_59 dim 1 : vector<1x384xf32>, i32 -> vector<1x384xf32>
    %420 = vector.broadcast %416 : f32 to vector<1x384xf32>
    %421 = arith.mulf %418, %420 : vector<1x384xf32>
    %422 = vector.broadcast %417 : f32 to vector<1x384xf32>
    %423 = arith.mulf %419, %422 : vector<1x384xf32>
    %424 = arith.addf %421, %423 : vector<1x384xf32>
    %425 = arith.addf %415, %424 : vector<1x384xf32>
    %c80 = arith.constant 80 : index
    %426 = memref.load %arg2[%c80] : memref<98xf32, #tpu.memory_space<smem>>
    %c81 = arith.constant 81 : index
    %427 = memref.load %arg2[%c81] : memref<98xf32, #tpu.memory_space<smem>>
    %c350_i32 = arith.constant 350 : i32
    %428 = tpu.dynamic_rotate %16 by %c350_i32 dim 1 : vector<1x384xf32>, i32 -> vector<1x384xf32>
    %c350_i32_60 = arith.constant 350 : i32
    %429 = tpu.dynamic_rotate %17 by %c350_i32_60 dim 1 : vector<1x384xf32>, i32 -> vector<1x384xf32>
    %430 = vector.broadcast %426 : f32 to vector<1x384xf32>
    %431 = arith.mulf %428, %430 : vector<1x384xf32>
    %432 = vector.broadcast %427 : f32 to vector<1x384xf32>
    %433 = arith.mulf %429, %432 : vector<1x384xf32>
    %434 = arith.addf %431, %433 : vector<1x384xf32>
    %435 = arith.addf %425, %434 : vector<1x384xf32>
    %c94 = arith.constant 94 : index
    %436 = memref.load %arg2[%c94] : memref<98xf32, #tpu.memory_space<smem>>
    %c95 = arith.constant 95 : index
    %437 = memref.load %arg2[%c95] : memref<98xf32, #tpu.memory_space<smem>>
    %c334_i32 = arith.constant 334 : i32
    %438 = tpu.dynamic_rotate %16 by %c334_i32 dim 1 : vector<1x384xf32>, i32 -> vector<1x384xf32>
    %c334_i32_61 = arith.constant 334 : i32
    %439 = tpu.dynamic_rotate %17 by %c334_i32_61 dim 1 : vector<1x384xf32>, i32 -> vector<1x384xf32>
    %440 = vector.broadcast %436 : f32 to vector<1x384xf32>
    %441 = arith.mulf %438, %440 : vector<1x384xf32>
    %442 = vector.broadcast %437 : f32 to vector<1x384xf32>
    %443 = arith.mulf %439, %442 : vector<1x384xf32>
    %444 = arith.addf %441, %443 : vector<1x384xf32>
    %445 = arith.addf %435, %444 : vector<1x384xf32>
    %446 = vector.extract_strided_slice %445 {offsets = [0, 0], sizes = [1, 256], strides = [1, 1]} : vector<1x384xf32> to vector<1x256xf32>
    %447 = arith.mulf %446, %6 : vector<1x256xf32>
    %448 = arith.addf %376, %447 : vector<1x256xf32>
    %c12 = arith.constant 12 : index
    %449 = memref.load %arg2[%c12] : memref<98xf32, #tpu.memory_space<smem>>
    %c13 = arith.constant 13 : index
    %450 = memref.load %arg2[%c13] : memref<98xf32, #tpu.memory_space<smem>>
    %c45_i32 = arith.constant 45 : i32
    %451 = tpu.dynamic_rotate %16 by %c45_i32 dim 1 : vector<1x384xf32>, i32 -> vector<1x384xf32>
    %c45_i32_62 = arith.constant 45 : i32
    %452 = tpu.dynamic_rotate %17 by %c45_i32_62 dim 1 : vector<1x384xf32>, i32 -> vector<1x384xf32>
    %453 = vector.broadcast %449 : f32 to vector<1x384xf32>
    %454 = arith.mulf %451, %453 : vector<1x384xf32>
    %455 = vector.broadcast %450 : f32 to vector<1x384xf32>
    %456 = arith.mulf %452, %455 : vector<1x384xf32>
    %457 = arith.addf %454, %456 : vector<1x384xf32>
    %c26 = arith.constant 26 : index
    %458 = memref.load %arg2[%c26] : memref<98xf32, #tpu.memory_space<smem>>
    %c27 = arith.constant 27 : index
    %459 = memref.load %arg2[%c27] : memref<98xf32, #tpu.memory_space<smem>>
    %c29_i32 = arith.constant 29 : i32
    %460 = tpu.dynamic_rotate %16 by %c29_i32 dim 1 : vector<1x384xf32>, i32 -> vector<1x384xf32>
    %c29_i32_63 = arith.constant 29 : i32
    %461 = tpu.dynamic_rotate %17 by %c29_i32_63 dim 1 : vector<1x384xf32>, i32 -> vector<1x384xf32>
    %462 = vector.broadcast %458 : f32 to vector<1x384xf32>
    %463 = arith.mulf %460, %462 : vector<1x384xf32>
    %464 = vector.broadcast %459 : f32 to vector<1x384xf32>
    %465 = arith.mulf %461, %464 : vector<1x384xf32>
    %466 = arith.addf %463, %465 : vector<1x384xf32>
    %467 = arith.addf %457, %466 : vector<1x384xf32>
    %c40 = arith.constant 40 : index
    %468 = memref.load %arg2[%c40] : memref<98xf32, #tpu.memory_space<smem>>
    %c41 = arith.constant 41 : index
    %469 = memref.load %arg2[%c41] : memref<98xf32, #tpu.memory_space<smem>>
    %c13_i32 = arith.constant 13 : i32
    %470 = tpu.dynamic_rotate %16 by %c13_i32 dim 1 : vector<1x384xf32>, i32 -> vector<1x384xf32>
    %c13_i32_64 = arith.constant 13 : i32
    %471 = tpu.dynamic_rotate %17 by %c13_i32_64 dim 1 : vector<1x384xf32>, i32 -> vector<1x384xf32>
    %472 = vector.broadcast %468 : f32 to vector<1x384xf32>
    %473 = arith.mulf %470, %472 : vector<1x384xf32>
    %474 = vector.broadcast %469 : f32 to vector<1x384xf32>
    %475 = arith.mulf %471, %474 : vector<1x384xf32>
    %476 = arith.addf %473, %475 : vector<1x384xf32>
    %477 = arith.addf %467, %476 : vector<1x384xf32>
    %c54 = arith.constant 54 : index
    %478 = memref.load %arg2[%c54] : memref<98xf32, #tpu.memory_space<smem>>
    %c55 = arith.constant 55 : index
    %479 = memref.load %arg2[%c55] : memref<98xf32, #tpu.memory_space<smem>>
    %c381_i32 = arith.constant 381 : i32
    %480 = tpu.dynamic_rotate %16 by %c381_i32 dim 1 : vector<1x384xf32>, i32 -> vector<1x384xf32>
    %c381_i32_65 = arith.constant 381 : i32
    %481 = tpu.dynamic_rotate %17 by %c381_i32_65 dim 1 : vector<1x384xf32>, i32 -> vector<1x384xf32>
    %482 = vector.broadcast %478 : f32 to vector<1x384xf32>
    %483 = arith.mulf %480, %482 : vector<1x384xf32>
    %484 = vector.broadcast %479 : f32 to vector<1x384xf32>
    %485 = arith.mulf %481, %484 : vector<1x384xf32>
    %486 = arith.addf %483, %485 : vector<1x384xf32>
    %487 = arith.addf %477, %486 : vector<1x384xf32>
    %c68 = arith.constant 68 : index
    %488 = memref.load %arg2[%c68] : memref<98xf32, #tpu.memory_space<smem>>
    %c69 = arith.constant 69 : index
    %489 = memref.load %arg2[%c69] : memref<98xf32, #tpu.memory_space<smem>>
    %c365_i32 = arith.constant 365 : i32
    %490 = tpu.dynamic_rotate %16 by %c365_i32 dim 1 : vector<1x384xf32>, i32 -> vector<1x384xf32>
    %c365_i32_66 = arith.constant 365 : i32
    %491 = tpu.dynamic_rotate %17 by %c365_i32_66 dim 1 : vector<1x384xf32>, i32 -> vector<1x384xf32>
    %492 = vector.broadcast %488 : f32 to vector<1x384xf32>
    %493 = arith.mulf %490, %492 : vector<1x384xf32>
    %494 = vector.broadcast %489 : f32 to vector<1x384xf32>
    %495 = arith.mulf %491, %494 : vector<1x384xf32>
    %496 = arith.addf %493, %495 : vector<1x384xf32>
    %497 = arith.addf %487, %496 : vector<1x384xf32>
    %c82 = arith.constant 82 : index
    %498 = memref.load %arg2[%c82] : memref<98xf32, #tpu.memory_space<smem>>
    %c83 = arith.constant 83 : index
    %499 = memref.load %arg2[%c83] : memref<98xf32, #tpu.memory_space<smem>>
    %c349_i32 = arith.constant 349 : i32
    %500 = tpu.dynamic_rotate %16 by %c349_i32 dim 1 : vector<1x384xf32>, i32 -> vector<1x384xf32>
    %c349_i32_67 = arith.constant 349 : i32
    %501 = tpu.dynamic_rotate %17 by %c349_i32_67 dim 1 : vector<1x384xf32>, i32 -> vector<1x384xf32>
    %502 = vector.broadcast %498 : f32 to vector<1x384xf32>
    %503 = arith.mulf %500, %502 : vector<1x384xf32>
    %504 = vector.broadcast %499 : f32 to vector<1x384xf32>
    %505 = arith.mulf %501, %504 : vector<1x384xf32>
    %506 = arith.addf %503, %505 : vector<1x384xf32>
    %507 = arith.addf %497, %506 : vector<1x384xf32>
    %c96 = arith.constant 96 : index
    %508 = memref.load %arg2[%c96] : memref<98xf32, #tpu.memory_space<smem>>
    %c97 = arith.constant 97 : index
    %509 = memref.load %arg2[%c97] : memref<98xf32, #tpu.memory_space<smem>>
    %c333_i32 = arith.constant 333 : i32
    %510 = tpu.dynamic_rotate %16 by %c333_i32 dim 1 : vector<1x384xf32>, i32 -> vector<1x384xf32>
    %c333_i32_68 = arith.constant 333 : i32
    %511 = tpu.dynamic_rotate %17 by %c333_i32_68 dim 1 : vector<1x384xf32>, i32 -> vector<1x384xf32>
    %512 = vector.broadcast %508 : f32 to vector<1x384xf32>
    %513 = arith.mulf %510, %512 : vector<1x384xf32>
    %514 = vector.broadcast %509 : f32 to vector<1x384xf32>
    %515 = arith.mulf %511, %514 : vector<1x384xf32>
    %516 = arith.addf %513, %515 : vector<1x384xf32>
    %517 = arith.addf %507, %516 : vector<1x384xf32>
    %518 = vector.extract_strided_slice %517 {offsets = [0, 0], sizes = [1, 256], strides = [1, 1]} : vector<1x384xf32> to vector<1x256xf32>
    %519 = arith.mulf %518, %7 : vector<1x256xf32>
    %520 = arith.addf %448, %519 : vector<1x256xf32>
    %521 = arith.negf %520 : vector<1x256xf32>
    %522 = math.exp %521 : vector<1x256xf32>
    %cst_69 = arith.constant 1.000000e+00 : f32
    %523 = vector.broadcast %cst_69 : f32 to vector<1x256xf32>
    %524 = arith.addf %523, %522 : vector<1x256xf32>
    %525 = arith.divf %523, %524 : vector<1x256xf32>
    %526 = vector.broadcast %525 : vector<1x256xf32> to vector<4x256xf32>
    %527 = arith.mulf %9, %526 : vector<4x256xf32>
    %c0_70 = arith.constant 0 : index
    %c0_71 = arith.constant 0 : index
    %c0_72 = arith.constant 0 : index
    %528 = vector.load %arg4[%c0_70, %c0_71, %c0_72] : memref<1x4x256xf32, #tpu.memory_space<vmem>>, vector<1x4x256xf32>
    %529 = vector.shape_cast %528 : vector<1x4x256xf32> to vector<4x256xf32>
    %530 = vector.shape_cast %527 : vector<4x256xf32> to vector<1x4x256xf32>
    tpu.vector_store %arg4[%c0_70, %c0_71, %c0_72], %530 {strides = array<i32>} : memref<1x4x256xf32, #tpu.memory_space<vmem>>, vector<1x4x256xf32>,
    return
  }
  func.func @transform_0(%arg0: i32) -> (i32, i32, i32) {
    %c0_i32 = arith.constant 0 : i32
    %c0_i32_0 = arith.constant 0 : i32
    %c0_i32_1 = arith.constant 0 : i32
    return %arg0, %c0_i32, %c0_i32_0 : i32, i32, i32
  }
  func.func @transform_1(%arg0: i32) -> i32 {
    %c0_i32 = arith.constant 0 : i32
    %c0_i32_0 = arith.constant 0 : i32
    return %c0_i32 : i32
  }
  func.func @transform_2(%arg0: i32) -> (i32, i32) {
    %c0_i32 = arith.constant 0 : i32
    %c0_i32_0 = arith.constant 0 : i32
    %c0_i32_1 = arith.constant 0 : i32
    return %c0_i32, %c0_i32_0 : i32, i32
  }
  func.func @transform_3(%arg0: i32) -> (i32, i32, i32) {
    %c0_i32 = arith.constant 0 : i32
    %c0_i32_0 = arith.constant 0 : i32
    %c0_i32_1 = arith.constant 0 : i32
    return %arg0, %c0_i32, %c0_i32_0 : i32, i32, i32
  }
}

</mosaic_0001>

<llo_original>
// kernel: tpu_custom_call.1
$region0: #{tpu_custom_call.1}
  #allocation0 [shape = 'u32[]', space=smem, size = 0x4, offset = 0x4, fixed_abs, tag = 'smem constant byte address 0x4 - core index']
  #allocation1 [shape = 'u32[72,128]{1,0:T(1,128)}', space=vmem, size = 0x9000, scoped, tag = 'internal scratch']
  %s0 = inlined_call_operand.hbm [shape: f32[2,4,256], index: 0, kind: input, shape index: {}]
  %s1 = inlined_call_operand.hbm [shape: f32[98], index: 1, kind: input, shape index: {}]
  %s2 = inlined_call_operand.hbm [shape: f32[7,256], index: 2, kind: input, shape index: {}]
  %s3 = inlined_call_operand.hbm [shape: f32[2,4,256], index: 3, kind: output, shape index: {}]
  %s4 = sld [smem:[#allocation0]]
  $region57: #{tpu_custom_call.1} parent=0
    _
  %s6 = ssub.s32 1, %s4
  %s7 = scalar_select 0, %s6, %s4
  $region1: #{tpu_custom_call.1} parent=0
    #allocation2 [shape = 'u8[8192]{0}', space=vmem, size = 0x2000, scoped, tag = 'input window, operand 0']
    #allocation3 [shape = 's32[2]{0}', space=sflag, size = 0x8, scoped, tag = 'scoped memory for tpu_custom_call.1']
    #allocation4 [shape = 's32[2]{0}', space=sflag, size = 0x8, scoped, tag = 'scoped memory for tpu_custom_call.1']
    #allocation5 [shape = 's32[2]{0}', space=sflag, size = 0x8, scoped, tag = 'scoped memory for tpu_custom_call.1']
    #allocation6 [shape = 'u8[512]{0}', space=smem, size = 0x200, scoped, tag = 'input window, operand 1, single buffered']
    #allocation7 [shape = 'u8[8192]{0}', space=vmem, size = 0x2000, scoped, tag = 'input window, operand 2, single buffered']
    #allocation8 [shape = 's32[1]{0}', space=sflag, size = 0x4, scoped, tag = 'scoped memory for tpu_custom_call.1']
    #allocation9 [shape = 'u8[8192]{0}', space=vmem, size = 0x2000, scoped, tag = 'output window, operand 0']
    %8 = vsyncpa [#allocation3], 0
    %s9 = scalar_lea.sflag [#allocation3], 1
    %10 = vsyncpa %s9, 0
    %11 = vsyncpa [#allocation5], 0
    %12 = vsyncpa [#allocation8], 0
    %13 = vsyncpa [#allocation4], 0
    %s14 = scalar_lea.sflag [#allocation4], 1
    %15 = vsyncpa %s14, 0
    loop: start=0, step=1, limit=4
    $region2: #{tpu_custom_call.1} parent=1 // loop_pre_header
      _
    $region3: #{tpu_custom_call.1} parent=1 // loop_header
      %s17 = sphi 0, %s21
      %p18 = scmp.ge.s32.totalorder %s17, 4
      %s27 = sphi 0, %s29
      %s30 = sphi 0, %s27
      %s31 = sphi 0, %s30
      %s47 = sphi 0, %s31
      %s51 = sphi 0, %s51
      %s53 = sphi 0, %s51
      %s54 = sphi 0, %s53
      %s68 = sphi 0, %s54
      %s72 = sphi 0, %s72
      %s74 = sphi 0, %s72
      %s75 = sphi 0, %s74
      %s89 = sphi 0, %s75
      %s95 = sphi 0, %s97
      %s98 = sphi 0, %s95
      %s99 = sphi 0, %s98
      %s115 = sphi 0, %s99
    $region4: #{tpu_custom_call.1} parent=1 // loop_header_branch
      %20 = sbr.rel (%p18) target = $region8
    $region5: #{tpu_custom_call.1} parent=1 // loop_body
      %s22 = ssub.s32 %s17, 1
      %s23 = ssub.s32 %s17, 2
      %s24 = sadd.s32 %s17, 1
      %s25 = ssub.s32 %s17, %s24
      %p26 = scmp.eq.s32.totalorder %s25, 0
      %s28 = sadd.s32 %s27, 1
      %s29 = scalar_select %p26, %s27, %s28
      %p32 = pneg %p26
      %p33 = scmp.eq.s32.totalorder %s17, 1
      %p34 = por %p32, %p33
      %p35 = scmp.ne.s32.totalorder %s27, %s30
      %p36 = scmp.eq.s32.totalorder %s17, 0
      %p37 = por %p35, %p36
      %p38 = scmp.ne.s32.totalorder %s27, %s30
      %p39 = scmp.eq.s32.totalorder %s22, 1
      %p40 = por %p38, %p39
      %p41 = scmp.ne.s32.totalorder %s30, %s31
      %p42 = scmp.eq.s32.totalorder %s22, 0
      %p43 = por %p41, %p42
      %p44 = scmp.ne.s32.totalorder %s30, %s31
      %p45 = scmp.eq.s32.totalorder %s23, 1
      %p46 = por %p44, %p45
      %p48 = scmp.ne.s32.totalorder %s31, %s47
      %p49 = scmp.eq.s32.totalorder %s23, 0
      %p50 = por %p48, %p49
      %s52 = sadd.s32 %s51, 1
      %p55 = scmp.eq.s32.totalorder %s17, 1
      %p56 = scmp.ne.s32.totalorder %s51, %s53
      %p57 = scmp.eq.s32.totalorder %s17, 0
      %p58 = por %p56, %p57
      %p59 = scmp.ne.s32.totalorder %s51, %s53
      %p60 = scmp.eq.s32.totalorder %s22, 1
      %p61 = por %p59, %p60
      %p62 = scmp.ne.s32.totalorder %s53, %s54
      %p63 = scmp.eq.s32.totalorder %s22, 0
      %p64 = por %p62, %p63
      %p65 = scmp.ne.s32.totalorder %s53, %s54
      %p66 = scmp.eq.s32.totalorder %s23, 1
      %p67 = por %p65, %p66
      %p69 = scmp.ne.s32.totalorder %s54, %s68
      %p70 = scmp.eq.s32.totalorder %s23, 0
      %p71 = por %p69, %p70
      %s73 = sadd.s32 %s72, 1
      %p76 = scmp.eq.s32.totalorder %s17, 1
      %p77 = scmp.ne.s32.totalorder %s72, %s74
      %p78 = scmp.eq.s32.totalorder %s17, 0
      %p79 = por %p77, %p78
      %p80 = scmp.ne.s32.totalorder %s72, %s74
      %p81 = scmp.eq.s32.totalorder %s22, 1
      %p82 = por %p80, %p81
      %p83 = scmp.ne.s32.totalorder %s74, %s75
      %p84 = scmp.eq.s32.totalorder %s22, 0
      %p85 = por %p83, %p84
      %p86 = scmp.ne.s32.totalorder %s74, %s75
      %p87 = scmp.eq.s32.totalorder %s23, 1
      %p88 = por %p86, %p87
      %p90 = scmp.ne.s32.totalorder %s75, %s89
      %p91 = scmp.eq.s32.totalorder %s23, 0
      %p92 = por %p90, %p91
      %s93 = ssub.s32 %s17, %s24
      %p94 = scmp.eq.s32.totalorder %s93, 0
      %s96 = sadd.s32 %s95, 1
      %s97 = scalar_select %p94, %s95, %s96
      %p100 = pneg %p94
      %p101 = scmp.eq.s32.totalorder %s17, 1
      %p102 = por %p100, %p101
      %p103 = scmp.ne.s32.totalorder %s95, %s98
      %p104 = scmp.eq.s32.totalorder %s17, 0
      %p105 = por %p103, %p104
      %p106 = scmp.ne.s32.totalorder %s95, %s98
      %p107 = scmp.eq.s32.totalorder %s22, 1
      %p108 = por %p106, %p107
      %p109 = scmp.ne.s32.totalorder %s98, %s99
      %p110 = scmp.eq.s32.totalorder %s22, 0
      %p111 = por %p109, %p110
      %p112 = scmp.ne.s32.totalorder %s98, %s99
      %p113 = scmp.eq.s32.totalorder %s23, 1
      %p114 = por %p112, %p113
      %p116 = scmp.ne.s32.totalorder %s99, %s115
      %p117 = scmp.eq.s32.totalorder %s23, 0
      %p118 = por %p116, %p117
      %p119 = scmp.le.s32.totalorder 1, %s17
      %p120 = scmp.lt.s32.totalorder %s17, 3
      %p121 = pnand %p119, %p120
      %p122 = pneg %p121
      // Predicated region
      $region9: #{tpu_custom_call.1} parent=5 // pred_check
        _
      $region10: #{tpu_custom_call.1} parent=5 // pred_check_branch
        %124 = sbr.rel (%p121) target = $region12
      $region11: #{tpu_custom_call.1} parent=5 // pred_region
        %s125 = ssub.s32 %s17, 1
        // Predicated region
        $region13: #{tpu_custom_call.1} parent=11 // pred_check
          %p126 = pneg %p64
        $region14: #{tpu_custom_call.1} parent=11 // pred_check_branch
          %128 = sbr.rel (%p126) target = $region16
        $region15: #{tpu_custom_call.1} parent=11 // pred_region
          %130 = vsyncadd [#allocation5], 0
          %s132 = sshll.u32 %s1, 4
          %s133 = int_to_ptr.hbm [resolvable:$true] %s132
          %135 = dma.hbm_to_smem %s133, 16, [#allocation6], [#allocation5]
        $region16: #{tpu_custom_call.1} parent=11 // pred_fallthru
          _
        // Predicated region
        $region17: #{tpu_custom_call.1} parent=11 // pred_check
          %p136 = pneg %p85
        $region18: #{tpu_custom_call.1} parent=11 // pred_check_branch
          %138 = sbr.rel (%p136) target = $region20
        $region19: #{tpu_custom_call.1} parent=11 // pred_region
          %140 = vsyncadd [#allocation8], 0
          %s142 = sshll.u32 %s2, 4
          %s143 = int_to_ptr.hbm [resolvable:$true] %s142
          %s144 = sshll.u32 [#allocation7], 4
          %s145 = int_to_ptr.vmem [resolvable:$true] %s144
          %147 = dma.hbm_to_vmem [thread:$0]  %s143, 256, %s145, [#allocation8]
        $region20: #{tpu_custom_call.1} parent=11 // pred_fallthru
          _
      $region12: #{tpu_custom_call.1} parent=5 // pred_fallthru
        _
      %p148 = scmp.lt.s32.totalorder %s17, 2
      // Predicated region
      $region21: #{tpu_custom_call.1} parent=5 // pred_check
        %p149 = pneg %p148
      $region22: #{tpu_custom_call.1} parent=5 // pred_check_branch
        %151 = sbr.rel (%p149) target = $region24
      $region23: #{tpu_custom_call.1} parent=5 // pred_region
        // Predicated region
        $region25: #{tpu_custom_call.1} parent=23 // pred_check
          %p152 = pneg %p37
        $region26: #{tpu_custom_call.1} parent=23 // pred_check_branch
          %154 = sbr.rel (%p152) target = $region28
        $region27: #{tpu_custom_call.1} parent=23 // pred_region
          %s155 = sand.u32 %s27, 1
          %s156 = scalar_lea.sflag [#allocation3], %s155
          %s157 = sand.u32 %s27, 1
          %s158 = smul.addr %s157, 8
          %s159 = scalar_lea.vmem [#allocation2], %s158
          %161 = vsyncadd %s156, 0
          %s162 = smul.addr %s17, 2
          %s163 = smul.addr %s162, 4
          %s164 = scalar_lea.hbm %s0, %s163
          %s166 = sshll.u32 %s164, 4
          %s167 = int_to_ptr.hbm [resolvable:$true] %s166
          %s168 = sshll.u32 %s159, 4
          %s169 = int_to_ptr.vmem [resolvable:$true] %s168
          %171 = dma.hbm_to_vmem [thread:$0]  %s167, 128, %s169, %s156
        $region28: #{tpu_custom_call.1} parent=23 // pred_fallthru
          _
      $region24: #{tpu_custom_call.1} parent=5 // pred_fallthru
        _
      %p172 = scmp.le.s32.totalorder 1, %s17
      %p173 = scmp.lt.s32.totalorder %s17, 3
      %p174 = pnand %p172, %p173
      %p175 = pneg %p174
      // Predicated region
      $region29: #{tpu_custom_call.1} parent=5 // pred_check
        _
      $region30: #{tpu_custom_call.1} parent=5 // pred_check_branch
        %177 = sbr.rel (%p174) target = $region32
      $region31: #{tpu_custom_call.1} parent=5 // pred_region
        %s178 = ssub.s32 %s17, 1
        %s179 = sand.u32 %s30, 1
        %s180 = scalar_lea.sflag [#allocation3], %s179
        %s181 = sand.u32 %s30, 1
        %s182 = smul.addr %s181, 8
        %s183 = scalar_lea.vmem [#allocation2], %s182
        // Predicated region
        $region33: #{tpu_custom_call.1} parent=31 // pred_check
          %p184 = pneg %p43
        $region34: #{tpu_custom_call.1} parent=31 // pred_check_branch
          %186 = sbr.rel (%p184) target = $region36
        $region35: #{tpu_custom_call.1} parent=31 // pred_region
          %188 = dma.done %s180, 128
        $region36: #{tpu_custom_call.1} parent=31 // pred_fallthru
          _
        // Predicated region
        $region37: #{tpu_custom_call.1} parent=31 // pred_check
          %p189 = pneg %p64
        $region38: #{tpu_custom_call.1} parent=31 // pred_check_branch
          %191 = sbr.rel (%p189) target = $region40
        $region39: #{tpu_custom_call.1} parent=31 // pred_region
          %193 = dma.done [#allocation5], 16
        $region40: #{tpu_custom_call.1} parent=31 // pred_fallthru
          _
        // Predicated region
        $region41: #{tpu_custom_call.1} parent=31 // pred_check
          %p194 = pneg %p85
        $region42: #{tpu_custom_call.1} parent=31 // pred_check_branch
          %196 = sbr.rel (%p194) target = $region44
        $region43: #{tpu_custom_call.1} parent=31 // pred_region
          %198 = dma.done [#allocation8], 256
        $region44: #{tpu_custom_call.1} parent=31 // pred_fallthru
          _
        %199 = sfence
        %s200 = sand.u32 %s30, 1
        %s201 = scalar_lea.sflag [#allocation3], %s200
        %s202 = sand.u32 %s30, 1
        %s203 = smul.addr %s202, 8
        %s204 = scalar_lea.vmem [#allocation2], %s203
        %p205 = pneg %p43
        %p206 = pneg %p40
        %p207 = pneg %p64
        %p208 = pneg %p61
        %p209 = pneg %p85
        %p210 = pneg %p82
        %p211 = pneg %p111
        %p212 = pneg %p108
        %s213 = sand.u32 %s98, 1
        %s214 = scalar_lea.sflag [#allocation4], %s213
        %s215 = sand.u32 %s98, 1
        %s216 = smul.addr %s215, 8
        %s217 = scalar_lea.vmem [#allocation9], %s216
        %v218 = vld [vmem:[#allocation7] ss:$8 sm:$0x3]
        %s219 = scalar_lea.vmem [#allocation7], 1
        %v220 = vld [vmem:[%s219] ss:$8 sm:$0x3]
        %s221 = scalar_lea.vmem [#allocation7], 2
        %v222 = vld [vmem:[%s221] ss:$8 sm:$0x3]
        %s223 = scalar_lea.vmem [#allocation7], 3
        %v224 = vld [vmem:[%s223] ss:$8 sm:$0x3]
        %s225 = scalar_lea.vmem [#allocation7], 4
        %v226 = vld [vmem:[%s225] ss:$8 sm:$0x3]
        %s227 = scalar_lea.vmem [#allocation7], 5
        %v228 = vld [vmem:[%s227] ss:$8 sm:$0x3]
        %s229 = scalar_lea.vmem [#allocation7], 6
        %v230 = vld [vmem:[%s229] ss:$8 sm:$0x3]
        %v231 = vld [vmem:[%s183] sm:$0xff]
        %233 = vst [vmem:[#allocation1] ss:$2 sm:$0xff] %v231
        %v234 = vld.sshfl [vmem:[#allocation1] sm:$0xff pattern:$0x75316420]
        %v235 = vld.sshfl [vmem:[#allocation1 + $0x8] sm:$0xff pattern:$0x75316420]
        %vm238 = vcmask 1043456
        %v239 = vsel %vm238, %v234, 0.0
        %v240 = vrot.slane %v239, 4
        %v241 = vadd.f32 %v239, %v240
        %v242 = vrot.slane %v241, 2
        %v243 = vadd.f32 %v241, %v242
        %v244 = vrot.slane %v243, 1
        %v245 = vadd.f32 %v243, %v244
        %v246 = vsel %vm238, %v235, 0.0
        %v247 = vrot.slane %v246, 4
        %v248 = vadd.f32 %v246, %v247
        %v249 = vrot.slane %v248, 2
        %v250 = vadd.f32 %v248, %v249
        %v251 = vrot.slane %v250, 1
        %v252 = vadd.f32 %v250, %v251
        %v253 = vmul.f32 %v245, 0.25
        %v254 = vmul.f32 %v252, 0.25
        %255 = vst [vmem:[#allocation1] ss:$2 sm:$0xff] %v231
        %v256 = vld.sshfl [vmem:[#allocation1] sm:$0xff pattern:$0x75316420]
        %v257 = vld.sshfl [vmem:[#allocation1 + $0x8] sm:$0xff pattern:$0x75316420]
        %v260 = vsel %vm238, %v256, -inf
        %v261 = vrot.slane %v260, 4
        %v262 = vmax.f32 %v260, %v261
        %v263 = vrot.slane %v262, 2
        %v264 = vmax.f32 %v262, %v263
        %v265 = vrot.slane %v264, 1
        %v266 = vmax.f32 %v264, %v265
        %v267 = vsel %vm238, %v257, -inf
        %v268 = vrot.slane %v267, 4
        %v269 = vmax.f32 %v267, %v268
        %v270 = vrot.slane %v269, 2
        %v271 = vmax.f32 %v269, %v270
        %v272 = vrot.slane %v271, 1
        %v273 = vmax.f32 %v271, %v272
        %s274 = sld [smem:[#allocation6]]
        %s275 = sld [smem:[#allocation6 + $0x1]]
        %276 = vrot.lane.b32.xlu0 %v253, 51
        %v277 = vpop.permute.xlu0 %276
        %278 = vrot.lane.b32.xlu0 %v254, 51
        %v279 = vpop.permute.xlu0 %278
        %280 = vrot.lane.b32.xlu0 0.0, 51
        %v281 = vpop.permute.xlu0 %280
        %v282 = vlaneseq
        %v283 = vand.u32 %v282, 127
        %vm284 = vcmp.lt.s32.totalorder %v283, 51
        %v285 = vsel %vm284, %v277, %v279
        %v286 = vsel %vm284, %v281, %v277
        %287 = vrot.lane.b32.xlu0 %v266, 51
        %v288 = vpop.permute.xlu0 %287
        %289 = vrot.lane.b32.xlu0 %v273, 51
        %v290 = vpop.permute.xlu0 %289
        %v291 = vsel %vm284, %v288, %v290
        %v292 = vsel %vm284, %v281, %v288
        %v293 = vstv %s274
        %v294 = vmul.f32 %v286, %v293
        %v295 = vmul.f32 %v285, %v293
        %v296 = vstv %s275
        %v297 = vmul.f32 %v292, %v296
        %v298 = vmul.f32 %v291, %v296
        %v299 = vadd.f32 %v294, %v297
        %v300 = vadd.f32 %v295, %v298
        %s301 = sld [smem:[#allocation6 + $0xe]]
        %s302 = sld [smem:[#allocation6 + $0xf]]
        %303 = vrot.lane.b32.xlu0 %v253, 35
        %v304 = vpop.permute.xlu0 %303
        %305 = vrot.lane.b32.xlu0 %v254, 35
        %v306 = vpop.permute.xlu0 %305
        %307 = vrot.lane.b32.xlu0 0.0, 35
        %v308 = vpop.permute.xlu0 %307
        %vm309 = vcmp.lt.s32.totalorder %v283, 35
        %v310 = vsel %vm309, %v304, %v306
        %v311 = vsel %vm309, %v308, %v304
        %312 = vrot.lane.b32.xlu0 %v266, 35
        %v313 = vpop.permute.xlu0 %312
        %314 = vrot.lane.b32.xlu0 %v273, 35
        %v315 = vpop.permute.xlu0 %314
        %v316 = vsel %vm309, %v313, %v315
        %v317 = vsel %vm309, %v308, %v313
        %v318 = vstv %s301
        %v319 = vmul.f32 %v311, %v318
        %v320 = vmul.f32 %v310, %v318
        %v321 = vstv %s302
        %v322 = vmul.f32 %v317, %v321
        %v323 = vmul.f32 %v316, %v321
        %v324 = vadd.f32 %v319, %v322
        %v325 = vadd.f32 %v320, %v323
        %v326 = vadd.f32 %v299, %v324
        %v327 = vadd.f32 %v300, %v325
        %s328 = sld [smem:[#allocation6 + $0x1c]]
        %s329 = sld [smem:[#allocation6 + $0x1d]]
        %330 = vrot.lane.b32.xlu0 %v253, 19
        %v331 = vpop.permute.xlu0 %330
        %332 = vrot.lane.b32.xlu0 %v254, 19
        %v333 = vpop.permute.xlu0 %332
        %334 = vrot.lane.b32.xlu0 0.0, 19
        %v335 = vpop.permute.xlu0 %334
        %vm336 = vcmp.lt.s32.totalorder %v283, 19
        %v337 = vsel %vm336, %v331, %v333
        %v338 = vsel %vm336, %v335, %v331
        %339 = vrot.lane.b32.xlu0 %v266, 19
        %v340 = vpop.permute.xlu0 %339
        %341 = vrot.lane.b32.xlu0 %v273, 19
        %v342 = vpop.permute.xlu0 %341
        %v343 = vsel %vm336, %v340, %v342
        %v344 = vsel %vm336, %v335, %v340
        %v345 = vstv %s328
        %v346 = vmul.f32 %v338, %v345
        %v347 = vmul.f32 %v337, %v345
        %v348 = vstv %s329
        %v349 = vmul.f32 %v344, %v348
        %v350 = vmul.f32 %v343, %v348
        %v351 = vadd.f32 %v346, %v349
        %v352 = vadd.f32 %v347, %v350
        %v353 = vadd.f32 %v326, %v351
        %v354 = vadd.f32 %v327, %v352
        %s355 = sld [smem:[#allocation6 + $0x2a]]
        %s356 = sld [smem:[#allocation6 + $0x2b]]
        %357 = vrot.lane.b32.xlu0 %v253, 3
        %v358 = vpop.permute.xlu0 %357
        %359 = vrot.lane.b32.xlu0 %v254, 3
        %v360 = vpop.permute.xlu0 %359
        %361 = vrot.lane.b32.xlu0 0.0, 3
        %v362 = vpop.permute.xlu0 %361
        %vm363 = vcmp.lt.s32.totalorder %v283, 3
        %v364 = vsel %vm363, %v358, %v360
        %v365 = vsel %vm363, %v362, %v358
        %366 = vrot.lane.b32.xlu0 %v266, 3
        %v367 = vpop.permute.xlu0 %366
        %368 = vrot.lane.b32.xlu0 %v273, 3
        %v369 = vpop.permute.xlu0 %368
        %v370 = vsel %vm363, %v367, %v369
        %v371 = vsel %vm363, %v362, %v367
        %v372 = vstv %s355
        %v373 = vmul.f32 %v365, %v372
        %v374 = vmul.f32 %v364, %v372
        %v375 = vstv %s356
        %v376 = vmul.f32 %v371, %v375
        %v377 = vmul.f32 %v370, %v375
        %v378 = vadd.f32 %v373, %v376
        %v379 = vadd.f32 %v374, %v377
        %v380 = vadd.f32 %v353, %v378
        %v381 = vadd.f32 %v354, %v379
        %s382 = sld [smem:[#allocation6 + $0x38]]
        %s383 = sld [smem:[#allocation6 + $0x39]]
        %384 = vrot.lane.b32.xlu0 %v253, 115
        %v385 = vpop.permute.xlu0 %384
        %386 = vrot.lane.b32.xlu0 %v254, 115
        %v387 = vpop.permute.xlu0 %386
        %388 = vrot.lane.b32.xlu0 0.0, 115
        %v389 = vpop.permute.xlu0 %388
        %vm390 = vcmp.lt.s32.totalorder %v283, 115
        %v391 = vsel %vm390, %v387, %v389
        %v392 = vsel %vm390, %v385, %v387
        %393 = vrot.lane.b32.xlu0 %v266, 115
        %v394 = vpop.permute.xlu0 %393
        %395 = vrot.lane.b32.xlu0 %v273, 115
        %v396 = vpop.permute.xlu0 %395
        %v397 = vsel %vm390, %v396, %v389
        %v398 = vsel %vm390, %v394, %v396
        %v399 = vstv %s382
        %v400 = vmul.f32 %v392, %v399
        %v401 = vmul.f32 %v391, %v399
        %v402 = vstv %s383
        %v403 = vmul.f32 %v398, %v402
        %v404 = vmul.f32 %v397, %v402
        %v405 = vadd.f32 %v400, %v403
        %v406 = vadd.f32 %v401, %v404
        %v407 = vadd.f32 %v380, %v405
        %v408 = vadd.f32 %v381, %v406
        %s409 = sld [smem:[#allocation6 + $0x46]]
        %s410 = sld [smem:[#allocation6 + $0x47]]
        %411 = vrot.lane.b32.xlu0 %v253, 99
        %v412 = vpop.permute.xlu0 %411
        %413 = vrot.lane.b32.xlu0 %v254, 99
        %v414 = vpop.permute.xlu0 %413
        %415 = vrot.lane.b32.xlu0 0.0, 99
        %v416 = vpop.permute.xlu0 %415
        %vm417 = vcmp.lt.s32.totalorder %v283, 99
        %v418 = vsel %vm417, %v414, %v416
        %v419 = vsel %vm417, %v412, %v414
        %420 = vrot.lane.b32.xlu0 %v266, 99
        %v421 = vpop.permute.xlu0 %420
        %422 = vrot.lane.b32.xlu0 %v273, 99
        %v423 = vpop.permute.xlu0 %422
        %v424 = vsel %vm417, %v423, %v416
        %v425 = vsel %vm417, %v421, %v423
        %v426 = vstv %s409
        %v427 = vmul.f32 %v419, %v426
        %v428 = vmul.f32 %v418, %v426
        %v429 = vstv %s410
        %v430 = vmul.f32 %v425, %v429
        %v431 = vmul.f32 %v424, %v429
        %v432 = vadd.f32 %v427, %v430
        %v433 = vadd.f32 %v428, %v431
        %v434 = vadd.f32 %v407, %v432
        %v435 = vadd.f32 %v408, %v433
        %s436 = sld [smem:[#allocation6 + $0x54]]
        %s437 = sld [smem:[#allocation6 + $0x55]]
        %438 = vrot.lane.b32.xlu0 %v253, 83
        %v439 = vpop.permute.xlu0 %438
        %440 = vrot.lane.b32.xlu0 %v254, 83
        %v441 = vpop.permute.xlu0 %440
        %442 = vrot.lane.b32.xlu0 0.0, 83
        %v443 = vpop.permute.xlu0 %442
        %vm444 = vcmp.lt.s32.totalorder %v283, 83
        %v445 = vsel %vm444, %v441, %v443
        %v446 = vsel %vm444, %v439, %v441
        %447 = vrot.lane.b32.xlu0 %v266, 83
        %v448 = vpop.permute.xlu0 %447
        %449 = vrot.lane.b32.xlu0 %v273, 83
        %v450 = vpop.permute.xlu0 %449
        %v451 = vsel %vm444, %v450, %v443
        %v452 = vsel %vm444, %v448, %v450
        %v453 = vstv %s436
        %v454 = vmul.f32 %v446, %v453
        %v455 = vmul.f32 %v445, %v453
        %v456 = vstv %s437
        %v457 = vmul.f32 %v452, %v456
        %v458 = vmul.f32 %v451, %v456
        %v459 = vadd.f32 %v454, %v457
        %v460 = vadd.f32 %v455, %v458
        %v461 = vadd.f32 %v434, %v459
        %v462 = vadd.f32 %v435, %v460
        %v464 = vperm.slane %v218, 0
        %v465 = vperm.slane %v218, 1
        %v468 = vmul.f32 %v461, %v464
        %v469 = vmul.f32 %v462, %v465
        %v470 = vadd.f32 %v468, 0.0
        %v471 = vadd.f32 %v469, 0.0
        %s472 = sld [smem:[#allocation6 + $0x2]]
        %s473 = sld [smem:[#allocation6 + $0x3]]
        %474 = vrot.lane.b32.xlu0 %v253, 50
        %v475 = vpop.permute.xlu0 %474
        %476 = vrot.lane.b32.xlu0 %v254, 50
        %v477 = vpop.permute.xlu0 %476
        %478 = vrot.lane.b32.xlu0 0.0, 50
        %v479 = vpop.permute.xlu0 %478
        %vm480 = vcmp.lt.s32.totalorder %v283, 50
        %v481 = vsel %vm480, %v475, %v477
        %v482 = vsel %vm480, %v479, %v475
        %483 = vrot.lane.b32.xlu0 %v266, 50
        %v484 = vpop.permute.xlu0 %483
        %485 = vrot.lane.b32.xlu0 %v273, 50
        %v486 = vpop.permute.xlu0 %485
        %v487 = vsel %vm480, %v484, %v486
        %v488 = vsel %vm480, %v479, %v484
        %v489 = vstv %s472
        %v490 = vmul.f32 %v482, %v489
        %v491 = vmul.f32 %v481, %v489
        %v492 = vstv %s473
        %v493 = vmul.f32 %v488, %v492
        %v494 = vmul.f32 %v487, %v492
        %v495 = vadd.f32 %v490, %v493
        %v496 = vadd.f32 %v491, %v494
        %s497 = sld [smem:[#allocation6 + $0x10]]
        %s498 = sld [smem:[#allocation6 + $0x11]]
        %499 = vrot.lane.b32.xlu0 %v253, 34
        %v500 = vpop.permute.xlu0 %499
        %501 = vrot.lane.b32.xlu0 %v254, 34
        %v502 = vpop.permute.xlu0 %501
        %503 = vrot.lane.b32.xlu0 0.0, 34
        %v504 = vpop.permute.xlu0 %503
        %vm505 = vcmp.lt.s32.totalorder %v283, 34
        %v506 = vsel %vm505, %v500, %v502
        %v507 = vsel %vm505, %v504, %v500
        %508 = vrot.lane.b32.xlu0 %v266, 34
        %v509 = vpop.permute.xlu0 %508
        %510 = vrot.lane.b32.xlu0 %v273, 34
        %v511 = vpop.permute.xlu0 %510
        %v512 = vsel %vm505, %v509, %v511
        %v513 = vsel %vm505, %v504, %v509
        %v514 = vstv %s497
        %v515 = vmul.f32 %v507, %v514
        %v516 = vmul.f32 %v506, %v514
        %v517 = vstv %s498
        %v518 = vmul.f32 %v513, %v517
        %v519 = vmul.f32 %v512, %v517
        %v520 = vadd.f32 %v515, %v518
        %v521 = vadd.f32 %v516, %v519
        %v522 = vadd.f32 %v495, %v520
        %v523 = vadd.f32 %v496, %v521
        %s524 = sld [smem:[#allocation6 + $0x1e]]
        %s525 = sld [smem:[#allocation6 + $0x1f]]
        %526 = vrot.lane.b32.xlu0 %v253, 18
        %v527 = vpop.permute.xlu0 %526
        %528 = vrot.lane.b32.xlu0 %v254, 18
        %v529 = vpop.permute.xlu0 %528
        %530 = vrot.lane.b32.xlu0 0.0, 18
        %v531 = vpop.permute.xlu0 %530
        %vm532 = vcmp.lt.s32.totalorder %v283, 18
        %v533 = vsel %vm532, %v527, %v529
        %v534 = vsel %vm532, %v531, %v527
        %535 = vrot.lane.b32.xlu0 %v266, 18
        %v536 = vpop.permute.xlu0 %535
        %537 = vrot.lane.b32.xlu0 %v273, 18
        %v538 = vpop.permute.xlu0 %537
        %v539 = vsel %vm532, %v536, %v538
        %v540 = vsel %vm532, %v531, %v536
        %v541 = vstv %s524
        %v542 = vmul.f32 %v534, %v541
        %v543 = vmul.f32 %v533, %v541
        %v544 = vstv %s525
        %v545 = vmul.f32 %v540, %v544
        %v546 = vmul.f32 %v539, %v544
        %v547 = vadd.f32 %v542, %v545
        %v548 = vadd.f32 %v543, %v546
        %v549 = vadd.f32 %v522, %v547
        %v550 = vadd.f32 %v523, %v548
        %s551 = sld [smem:[#allocation6 + $0x2c]]
        %s552 = sld [smem:[#allocation6 + $0x2d]]
        %553 = vrot.lane.b32.xlu0 %v253, 2
        %v554 = vpop.permute.xlu0 %553
        %555 = vrot.lane.b32.xlu0 %v254, 2
        %v556 = vpop.permute.xlu0 %555
        %557 = vrot.lane.b32.xlu0 0.0, 2
        %v558 = vpop.permute.xlu0 %557
        %vm559 = vcmp.lt.s32.totalorder %v283, 2
        %v560 = vsel %vm559, %v554, %v556
        %v561 = vsel %vm559, %v558, %v554
        %562 = vrot.lane.b32.xlu0 %v266, 2
        %v563 = vpop.permute.xlu0 %562
        %564 = vrot.lane.b32.xlu0 %v273, 2
        %v565 = vpop.permute.xlu0 %564
        %v566 = vsel %vm559, %v563, %v565
        %v567 = vsel %vm559, %v558, %v563
        %v568 = vstv %s551
        %v569 = vmul.f32 %v561, %v568
        %v570 = vmul.f32 %v560, %v568
        %v571 = vstv %s552
        %v572 = vmul.f32 %v567, %v571
        %v573 = vmul.f32 %v566, %v571
        %v574 = vadd.f32 %v569, %v572
        %v575 = vadd.f32 %v570, %v573
        %v576 = vadd.f32 %v549, %v574
        %v577 = vadd.f32 %v550, %v575
        %s578 = sld [smem:[#allocation6 + $0x3a]]
        %s579 = sld [smem:[#allocation6 + $0x3b]]
        %580 = vrot.lane.b32.xlu0 %v253, 114
        %v581 = vpop.permute.xlu0 %580
        %582 = vrot.lane.b32.xlu0 %v254, 114
        %v583 = vpop.permute.xlu0 %582
        %584 = vrot.lane.b32.xlu0 0.0, 114
        %v585 = vpop.permute.xlu0 %584
        %vm586 = vcmp.lt.s32.totalorder %v283, 114
        %v587 = vsel %vm586, %v583, %v585
        %v588 = vsel %vm586, %v581, %v583
        %589 = vrot.lane.b32.xlu0 %v266, 114
        %v590 = vpop.permute.xlu0 %589
        %591 = vrot.lane.b32.xlu0 %v273, 114
        %v592 = vpop.permute.xlu0 %591
        %v593 = vsel %vm586, %v592, %v585
        %v594 = vsel %vm586, %v590, %v592
        %v595 = vstv %s578
        %v596 = vmul.f32 %v588, %v595
        %v597 = vmul.f32 %v587, %v595
        %v598 = vstv %s579
        %v599 = vmul.f32 %v594, %v598
        %v600 = vmul.f32 %v593, %v598
        %v601 = vadd.f32 %v596, %v599
        %v602 = vadd.f32 %v597, %v600
        %v603 = vadd.f32 %v576, %v601
        %v604 = vadd.f32 %v577, %v602
        %s605 = sld [smem:[#allocation6 + $0x48]]
        %s606 = sld [smem:[#allocation6 + $0x49]]
        %607 = vrot.lane.b32.xlu0 %v253, 98
        %v608 = vpop.permute.xlu0 %607
        %609 = vrot.lane.b32.xlu0 %v254, 98
        %v610 = vpop.permute.xlu0 %609
        %611 = vrot.lane.b32.xlu0 0.0, 98
        %v612 = vpop.permute.xlu0 %611
        %vm613 = vcmp.lt.s32.totalorder %v283, 98
        %v614 = vsel %vm613, %v610, %v612
        %v615 = vsel %vm613, %v608, %v610
        %616 = vrot.lane.b32.xlu0 %v266, 98
        %v617 = vpop.permute.xlu0 %616
        %618 = vrot.lane.b32.xlu0 %v273, 98
        %v619 = vpop.permute.xlu0 %618
        %v620 = vsel %vm613, %v619, %v612
        %v621 = vsel %vm613, %v617, %v619
        %v622 = vstv %s605
        %v623 = vmul.f32 %v615, %v622
        %v624 = vmul.f32 %v614, %v622
        %v625 = vstv %s606
        %v626 = vmul.f32 %v621, %v625
        %v627 = vmul.f32 %v620, %v625
        %v628 = vadd.f32 %v623, %v626
        %v629 = vadd.f32 %v624, %v627
        %v630 = vadd.f32 %v603, %v628
        %v631 = vadd.f32 %v604, %v629
        %s632 = sld [smem:[#allocation6 + $0x56]]
        %s633 = sld [smem:[#allocation6 + $0x57]]
        %634 = vrot.lane.b32.xlu0 %v253, 82
        %v635 = vpop.permute.xlu0 %634
        %636 = vrot.lane.b32.xlu0 %v254, 82
        %v637 = vpop.permute.xlu0 %636
        %638 = vrot.lane.b32.xlu0 0.0, 82
        %v639 = vpop.permute.xlu0 %638
        %vm640 = vcmp.lt.s32.totalorder %v283, 82
        %v641 = vsel %vm640, %v637, %v639
        %v642 = vsel %vm640, %v635, %v637
        %643 = vrot.lane.b32.xlu0 %v266, 82
        %v644 = vpop.permute.xlu0 %643
        %645 = vrot.lane.b32.xlu0 %v273, 82
        %v646 = vpop.permute.xlu0 %645
        %v647 = vsel %vm640, %v646, %v639
        %v648 = vsel %vm640, %v644, %v646
        %v649 = vstv %s632
        %v650 = vmul.f32 %v642, %v649
        %v651 = vmul.f32 %v641, %v649
        %v652 = vstv %s633
        %v653 = vmul.f32 %v648, %v652
        %v654 = vmul.f32 %v647, %v652
        %v655 = vadd.f32 %v650, %v653
        %v656 = vadd.f32 %v651, %v654
        %v657 = vadd.f32 %v630, %v655
        %v658 = vadd.f32 %v631, %v656
        %v660 = vperm.slane %v220, 0
        %v661 = vperm.slane %v220, 1
        %v664 = vmul.f32 %v657, %v660
        %v665 = vmul.f32 %v658, %v661
        %v666 = vadd.f32 %v470, %v664
        %v667 = vadd.f32 %v471, %v665
        %s668 = sld [smem:[#allocation6 + $0x4]]
        %s669 = sld [smem:[#allocation6 + $0x5]]
        %670 = vrot.lane.b32.xlu0 %v253, 49
        %v671 = vpop.permute.xlu0 %670
        %672 = vrot.lane.b32.xlu0 %v254, 49
        %v673 = vpop.permute.xlu0 %672
        %674 = vrot.lane.b32.xlu0 0.0, 49
        %v675 = vpop.permute.xlu0 %674
        %vm676 = vcmp.lt.s32.totalorder %v283, 49
        %v677 = vsel %vm676, %v671, %v673
        %v678 = vsel %vm676, %v675, %v671
        %679 = vrot.lane.b32.xlu0 %v266, 49
        %v680 = vpop.permute.xlu0 %679
        %681 = vrot.lane.b32.xlu0 %v273, 49
        %v682 = vpop.permute.xlu0 %681
        %v683 = vsel %vm676, %v680, %v682
        %v684 = vsel %vm676, %v675, %v680
        %v685 = vstv %s668
        %v686 = vmul.f32 %v678, %v685
        %v687 = vmul.f32 %v677, %v685
        %v688 = vstv %s669
        %v689 = vmul.f32 %v684, %v688
        %v690 = vmul.f32 %v683, %v688
        %v691 = vadd.f32 %v686, %v689
        %v692 = vadd.f32 %v687, %v690
        %s693 = sld [smem:[#allocation6 + $0x12]]
        %s694 = sld [smem:[#allocation6 + $0x13]]
        %695 = vrot.lane.b32.xlu0 %v253, 33
        %v696 = vpop.permute.xlu0 %695
        %697 = vrot.lane.b32.xlu0 %v254, 33
        %v698 = vpop.permute.xlu0 %697
        %699 = vrot.lane.b32.xlu0 0.0, 33
        %v700 = vpop.permute.xlu0 %699
        %vm701 = vcmp.lt.s32.totalorder %v283, 33
        %v702 = vsel %vm701, %v696, %v698
        %v703 = vsel %vm701, %v700, %v696
        %704 = vrot.lane.b32.xlu0 %v266, 33
        %v705 = vpop.permute.xlu0 %704
        %706 = vrot.lane.b32.xlu0 %v273, 33
        %v707 = vpop.permute.xlu0 %706
        %v708 = vsel %vm701, %v705, %v707
        %v709 = vsel %vm701, %v700, %v705
        %v710 = vstv %s693
        %v711 = vmul.f32 %v703, %v710
        %v712 = vmul.f32 %v702, %v710
        %v713 = vstv %s694
        %v714 = vmul.f32 %v709, %v713
        %v715 = vmul.f32 %v708, %v713
        %v716 = vadd.f32 %v711, %v714
        %v717 = vadd.f32 %v712, %v715
        %v718 = vadd.f32 %v691, %v716
        %v719 = vadd.f32 %v692, %v717
        %s720 = sld [smem:[#allocation6 + $0x20]]
        %s721 = sld [smem:[#allocation6 + $0x21]]
        %722 = vrot.lane.b32.xlu0 %v253, 17
        %v723 = vpop.permute.xlu0 %722
        %724 = vrot.lane.b32.xlu0 %v254, 17
        %v725 = vpop.permute.xlu0 %724
        %726 = vrot.lane.b32.xlu0 0.0, 17
        %v727 = vpop.permute.xlu0 %726
        %vm728 = vcmp.lt.s32.totalorder %v283, 17
        %v729 = vsel %vm728, %v723, %v725
        %v730 = vsel %vm728, %v727, %v723
        %731 = vrot.lane.b32.xlu0 %v266, 17
        %v732 = vpop.permute.xlu0 %731
        %733 = vrot.lane.b32.xlu0 %v273, 17
        %v734 = vpop.permute.xlu0 %733
        %v735 = vsel %vm728, %v732, %v734
        %v736 = vsel %vm728, %v727, %v732
        %v737 = vstv %s720
        %v738 = vmul.f32 %v730, %v737
        %v739 = vmul.f32 %v729, %v737
        %v740 = vstv %s721
        %v741 = vmul.f32 %v736, %v740
        %v742 = vmul.f32 %v735, %v740
        %v743 = vadd.f32 %v738, %v741
        %v744 = vadd.f32 %v739, %v742
        %v745 = vadd.f32 %v718, %v743
        %v746 = vadd.f32 %v719, %v744
        %s747 = sld [smem:[#allocation6 + $0x2e]]
        %s748 = sld [smem:[#allocation6 + $0x2f]]
        %749 = vrot.lane.b32.xlu0 %v253, 1
        %v750 = vpop.permute.xlu0 %749
        %751 = vrot.lane.b32.xlu0 %v254, 1
        %v752 = vpop.permute.xlu0 %751
        %753 = vrot.lane.b32.xlu0 0.0, 1
        %v754 = vpop.permute.xlu0 %753
        %vm755 = vcmp.lt.s32.totalorder %v283, 1
        %v756 = vsel %vm755, %v750, %v752
        %v757 = vsel %vm755, %v754, %v750
        %758 = vrot.lane.b32.xlu0 %v266, 1
        %v759 = vpop.permute.xlu0 %758
        %760 = vrot.lane.b32.xlu0 %v273, 1
        %v761 = vpop.permute.xlu0 %760
        %v762 = vsel %vm755, %v759, %v761
        %v763 = vsel %vm755, %v754, %v759
        %v764 = vstv %s747
        %v765 = vmul.f32 %v757, %v764
        %v766 = vmul.f32 %v756, %v764
        %v767 = vstv %s748
        %v768 = vmul.f32 %v763, %v767
        %v769 = vmul.f32 %v762, %v767
        %v770 = vadd.f32 %v765, %v768
        %v771 = vadd.f32 %v766, %v769
        %v772 = vadd.f32 %v745, %v770
        %v773 = vadd.f32 %v746, %v771
        %s774 = sld [smem:[#allocation6 + $0x3c]]
        %s775 = sld [smem:[#allocation6 + $0x3d]]
        %776 = vrot.lane.b32.xlu0 %v253, 113
        %v777 = vpop.permute.xlu0 %776
        %778 = vrot.lane.b32.xlu0 %v254, 113
        %v779 = vpop.permute.xlu0 %778
        %780 = vrot.lane.b32.xlu0 0.0, 113
        %v781 = vpop.permute.xlu0 %780
        %vm782 = vcmp.lt.s32.totalorder %v283, 113
        %v783 = vsel %vm782, %v779, %v781
        %v784 = vsel %vm782, %v777, %v779
        %785 = vrot.lane.b32.xlu0 %v266, 113
        %v786 = vpop.permute.xlu0 %785
        %787 = vrot.lane.b32.xlu0 %v273, 113
        %v788 = vpop.permute.xlu0 %787
        %v789 = vsel %vm782, %v788, %v781
        %v790 = vsel %vm782, %v786, %v788
        %v791 = vstv %s774
        %v792 = vmul.f32 %v784, %v791
        %v793 = vmul.f32 %v783, %v791
        %v794 = vstv %s775
        %v795 = vmul.f32 %v790, %v794
        %v796 = vmul.f32 %v789, %v794
        %v797 = vadd.f32 %v792, %v795
        %v798 = vadd.f32 %v793, %v796
        %v799 = vadd.f32 %v772, %v797
        %v800 = vadd.f32 %v773, %v798
        %s801 = sld [smem:[#allocation6 + $0x4a]]
        %s802 = sld [smem:[#allocation6 + $0x4b]]
        %803 = vrot.lane.b32.xlu0 %v253, 97
        %v804 = vpop.permute.xlu0 %803
        %805 = vrot.lane.b32.xlu0 %v254, 97
        %v806 = vpop.permute.xlu0 %805
        %807 = vrot.lane.b32.xlu0 0.0, 97
        %v808 = vpop.permute.xlu0 %807
        %vm809 = vcmp.lt.s32.totalorder %v283, 97
        %v810 = vsel %vm809, %v806, %v808
        %v811 = vsel %vm809, %v804, %v806
        %812 = vrot.lane.b32.xlu0 %v266, 97
        %v813 = vpop.permute.xlu0 %812
        %814 = vrot.lane.b32.xlu0 %v273, 97
        %v815 = vpop.permute.xlu0 %814
        %v816 = vsel %vm809, %v815, %v808
        %v817 = vsel %vm809, %v813, %v815
        %v818 = vstv %s801
        %v819 = vmul.f32 %v811, %v818
        %v820 = vmul.f32 %v810, %v818
        %v821 = vstv %s802
        %v822 = vmul.f32 %v817, %v821
        %v823 = vmul.f32 %v816, %v821
        %v824 = vadd.f32 %v819, %v822
        %v825 = vadd.f32 %v820, %v823
        %v826 = vadd.f32 %v799, %v824
        %v827 = vadd.f32 %v800, %v825
        %s828 = sld [smem:[#allocation6 + $0x58]]
        %s829 = sld [smem:[#allocation6 + $0x59]]
        %830 = vrot.lane.b32.xlu0 %v253, 81
        %v831 = vpop.permute.xlu0 %830
        %832 = vrot.lane.b32.xlu0 %v254, 81
        %v833 = vpop.permute.xlu0 %832
        %834 = vrot.lane.b32.xlu0 0.0, 81
        %v835 = vpop.permute.xlu0 %834
        %vm836 = vcmp.lt.s32.totalorder %v283, 81
        %v837 = vsel %vm836, %v833, %v835
        %v838 = vsel %vm836, %v831, %v833
        %839 = vrot.lane.b32.xlu0 %v266, 81
        %v840 = vpop.permute.xlu0 %839
        %841 = vrot.lane.b32.xlu0 %v273, 81
        %v842 = vpop.permute.xlu0 %841
        %v843 = vsel %vm836, %v842, %v835
        %v844 = vsel %vm836, %v840, %v842
        %v845 = vstv %s828
        %v846 = vmul.f32 %v838, %v845
        %v847 = vmul.f32 %v837, %v845
        %v848 = vstv %s829
        %v849 = vmul.f32 %v844, %v848
        %v850 = vmul.f32 %v843, %v848
        %v851 = vadd.f32 %v846, %v849
        %v852 = vadd.f32 %v847, %v850
        %v853 = vadd.f32 %v826, %v851
        %v854 = vadd.f32 %v827, %v852
        %v856 = vperm.slane %v222, 0
        %v857 = vperm.slane %v222, 1
        %v860 = vmul.f32 %v853, %v856
        %v861 = vmul.f32 %v854, %v857
        %v862 = vadd.f32 %v666, %v860
        %v863 = vadd.f32 %v667, %v861
        %s864 = sld [smem:[#allocation6 + $0x6]]
        %s865 = sld [smem:[#allocation6 + $0x7]]
        %866 = vrot.lane.b32.xlu0 %v253, 48
        %v867 = vpop.permute.xlu0 %866
        %868 = vrot.lane.b32.xlu0 %v254, 48
        %v869 = vpop.permute.xlu0 %868
        %870 = vrot.lane.b32.xlu0 0.0, 48
        %v871 = vpop.permute.xlu0 %870
        %vm872 = vcmp.lt.s32.totalorder %v283, 48
        %v873 = vsel %vm872, %v867, %v869
        %v874 = vsel %vm872, %v871, %v867
        %875 = vrot.lane.b32.xlu0 %v266, 48
        %v876 = vpop.permute.xlu0 %875
        %877 = vrot.lane.b32.xlu0 %v273, 48
        %v878 = vpop.permute.xlu0 %877
        %v879 = vsel %vm872, %v876, %v878
        %v880 = vsel %vm872, %v871, %v876
        %v881 = vstv %s864
        %v882 = vmul.f32 %v874, %v881
        %v883 = vmul.f32 %v873, %v881
        %v884 = vstv %s865
        %v885 = vmul.f32 %v880, %v884
        %v886 = vmul.f32 %v879, %v884
        %v887 = vadd.f32 %v882, %v885
        %v888 = vadd.f32 %v883, %v886
        %s889 = sld [smem:[#allocation6 + $0x14]]
        %s890 = sld [smem:[#allocation6 + $0x15]]
        %891 = vrot.lane.b32.xlu0 %v253, 32
        %v892 = vpop.permute.xlu0 %891
        %893 = vrot.lane.b32.xlu0 %v254, 32
        %v894 = vpop.permute.xlu0 %893
        %895 = vrot.lane.b32.xlu0 0.0, 32
        %v896 = vpop.permute.xlu0 %895
        %vm897 = vcmp.lt.s32.totalorder %v283, 32
        %v898 = vsel %vm897, %v892, %v894
        %v899 = vsel %vm897, %v896, %v892
        %900 = vrot.lane.b32.xlu0 %v266, 32
        %v901 = vpop.permute.xlu0 %900
        %902 = vrot.lane.b32.xlu0 %v273, 32
        %v903 = vpop.permute.xlu0 %902
        %v904 = vsel %vm897, %v901, %v903
        %v905 = vsel %vm897, %v896, %v901
        %v906 = vstv %s889
        %v907 = vmul.f32 %v899, %v906
        %v908 = vmul.f32 %v898, %v906
        %v909 = vstv %s890
        %v910 = vmul.f32 %v905, %v909
        %v911 = vmul.f32 %v904, %v909
        %v912 = vadd.f32 %v907, %v910
        %v913 = vadd.f32 %v908, %v911
        %v914 = vadd.f32 %v887, %v912
        %v915 = vadd.f32 %v888, %v913
        %s916 = sld [smem:[#allocation6 + $0x22]]
        %s917 = sld [smem:[#allocation6 + $0x23]]
        %918 = vrot.lane.b32.xlu0 %v253, 16
        %v919 = vpop.permute.xlu0 %918
        %920 = vrot.lane.b32.xlu0 %v254, 16
        %v921 = vpop.permute.xlu0 %920
        %922 = vrot.lane.b32.xlu0 0.0, 16
        %v923 = vpop.permute.xlu0 %922
        %vm924 = vcmp.lt.s32.totalorder %v283, 16
        %v925 = vsel %vm924, %v919, %v921
        %v926 = vsel %vm924, %v923, %v919
        %927 = vrot.lane.b32.xlu0 %v266, 16
        %v928 = vpop.permute.xlu0 %927
        %929 = vrot.lane.b32.xlu0 %v273, 16
        %v930 = vpop.permute.xlu0 %929
        %v931 = vsel %vm924, %v928, %v930
        %v932 = vsel %vm924, %v923, %v928
        %v933 = vstv %s916
        %v934 = vmul.f32 %v926, %v933
        %v935 = vmul.f32 %v925, %v933
        %v936 = vstv %s917
        %v937 = vmul.f32 %v932, %v936
        %v938 = vmul.f32 %v931, %v936
        %v939 = vadd.f32 %v934, %v937
        %v940 = vadd.f32 %v935, %v938
        %v941 = vadd.f32 %v914, %v939
        %v942 = vadd.f32 %v915, %v940
        %s943 = sld [smem:[#allocation6 + $0x30]]
        %s944 = sld [smem:[#allocation6 + $0x31]]
        %v945 = vstv %s943
        %v946 = vmul.f32 %v253, %v945
        %v947 = vmul.f32 %v254, %v945
        %v948 = vstv %s944
        %v949 = vmul.f32 %v266, %v948
        %v950 = vmul.f32 %v273, %v948
        %v951 = vadd.f32 %v946, %v949
        %v952 = vadd.f32 %v947, %v950
        %v953 = vadd.f32 %v941, %v951
        %v954 = vadd.f32 %v942, %v952
        %s955 = sld [smem:[#allocation6 + $0x3e]]
        %s956 = sld [smem:[#allocation6 + $0x3f]]
        %957 = vrot.lane.b32.xlu0 %v253, 112
        %v958 = vpop.permute.xlu0 %957
        %959 = vrot.lane.b32.xlu0 %v254, 112
        %v960 = vpop.permute.xlu0 %959
        %961 = vrot.lane.b32.xlu0 0.0, 112
        %v962 = vpop.permute.xlu0 %961
        %vm963 = vcmp.lt.s32.totalorder %v283, 112
        %v964 = vsel %vm963, %v960, %v962
        %v965 = vsel %vm963, %v958, %v960
        %966 = vrot.lane.b32.xlu0 %v266, 112
        %v967 = vpop.permute.xlu0 %966
        %968 = vrot.lane.b32.xlu0 %v273, 112
        %v969 = vpop.permute.xlu0 %968
        %v970 = vsel %vm963, %v969, %v962
        %v971 = vsel %vm963, %v967, %v969
        %v972 = vstv %s955
        %v973 = vmul.f32 %v965, %v972
        %v974 = vmul.f32 %v964, %v972
        %v975 = vstv %s956
        %v976 = vmul.f32 %v971, %v975
        %v977 = vmul.f32 %v970, %v975
        %v978 = vadd.f32 %v973, %v976
        %v979 = vadd.f32 %v974, %v977
        %v980 = vadd.f32 %v953, %v978
        %v981 = vadd.f32 %v954, %v979
        %s982 = sld [smem:[#allocation6 + $0x4c]]
        %s983 = sld [smem:[#allocation6 + $0x4d]]
        %984 = vrot.lane.b32.xlu0 %v253, 96
        %v985 = vpop.permute.xlu0 %984
        %986 = vrot.lane.b32.xlu0 %v254, 96
        %v987 = vpop.permute.xlu0 %986
        %988 = vrot.lane.b32.xlu0 0.0, 96
        %v989 = vpop.permute.xlu0 %988
        %vm990 = vcmp.lt.s32.totalorder %v283, 96
        %v991 = vsel %vm990, %v987, %v989
        %v992 = vsel %vm990, %v985, %v987
        %993 = vrot.lane.b32.xlu0 %v266, 96
        %v994 = vpop.permute.xlu0 %993
        %995 = vrot.lane.b32.xlu0 %v273, 96
        %v996 = vpop.permute.xlu0 %995
        %v997 = vsel %vm990, %v996, %v989
        %v998 = vsel %vm990, %v994, %v996
        %v999 = vstv %s982
        %v1000 = vmul.f32 %v992, %v999
        %v1001 = vmul.f32 %v991, %v999
        %v1002 = vstv %s983
        %v1003 = vmul.f32 %v998, %v1002
        %v1004 = vmul.f32 %v997, %v1002
        %v1005 = vadd.f32 %v1000, %v1003
        %v1006 = vadd.f32 %v1001, %v1004
        %v1007 = vadd.f32 %v980, %v1005
        %v1008 = vadd.f32 %v981, %v1006
        %s1009 = sld [smem:[#allocation6 + $0x5a]]
        %s1010 = sld [smem:[#allocation6 + $0x5b]]
        %1011 = vrot.lane.b32.xlu0 %v253, 80
        %v1012 = vpop.permute.xlu0 %1011
        %1013 = vrot.lane.b32.xlu0 %v254, 80
        %v1014 = vpop.permute.xlu0 %1013
        %1015 = vrot.lane.b32.xlu0 0.0, 80
        %v1016 = vpop.permute.xlu0 %1015
        %vm1017 = vcmp.lt.s32.totalorder %v283, 80
        %v1018 = vsel %vm1017, %v1014, %v1016
        %v1019 = vsel %vm1017, %v1012, %v1014
        %1020 = vrot.lane.b32.xlu0 %v266, 80
        %v1021 = vpop.permute.xlu0 %1020
        %1022 = vrot.lane.b32.xlu0 %v273, 80
        %v1023 = vpop.permute.xlu0 %1022
        %v1024 = vsel %vm1017, %v1023, %v1016
        %v1025 = vsel %vm1017, %v1021, %v1023
        %v1026 = vstv %s1009
        %v1027 = vmul.f32 %v1019, %v1026
        %v1028 = vmul.f32 %v1018, %v1026
        %v1029 = vstv %s1010
        %v1030 = vmul.f32 %v1025, %v1029
        %v1031 = vmul.f32 %v1024, %v1029
        %v1032 = vadd.f32 %v1027, %v1030
        %v1033 = vadd.f32 %v1028, %v1031
        %v1034 = vadd.f32 %v1007, %v1032
        %v1035 = vadd.f32 %v1008, %v1033
        %v1037 = vperm.slane %v224, 0
        %v1038 = vperm.slane %v224, 1
        %v1041 = vmul.f32 %v1034, %v1037
        %v1042 = vmul.f32 %v1035, %v1038
        %v1043 = vadd.f32 %v862, %v1041
        %v1044 = vadd.f32 %v863, %v1042
        %s1045 = sld [smem:[#allocation6 + $0x8]]
        %s1046 = sld [smem:[#allocation6 + $0x9]]
        %1047 = vrot.lane.b32.xlu0 %v253, 47
        %v1048 = vpop.permute.xlu0 %1047
        %1049 = vrot.lane.b32.xlu0 %v254, 47
        %v1050 = vpop.permute.xlu0 %1049
        %1051 = vrot.lane.b32.xlu0 0.0, 47
        %v1052 = vpop.permute.xlu0 %1051
        %vm1053 = vcmp.lt.s32.totalorder %v283, 47
        %v1054 = vsel %vm1053, %v1048, %v1050
        %v1055 = vsel %vm1053, %v1052, %v1048
        %1056 = vrot.lane.b32.xlu0 %v266, 47
        %v1057 = vpop.permute.xlu0 %1056
        %1058 = vrot.lane.b32.xlu0 %v273, 47
        %v1059 = vpop.permute.xlu0 %1058
        %v1060 = vsel %vm1053, %v1057, %v1059
        %v1061 = vsel %vm1053, %v1052, %v1057
        %v1062 = vstv %s1045
        %v1063 = vmul.f32 %v1055, %v1062
        %v1064 = vmul.f32 %v1054, %v1062
        %v1065 = vstv %s1046
        %v1066 = vmul.f32 %v1061, %v1065
        %v1067 = vmul.f32 %v1060, %v1065
        %v1068 = vadd.f32 %v1063, %v1066
        %v1069 = vadd.f32 %v1064, %v1067
        %s1070 = sld [smem:[#allocation6 + $0x16]]
        %s1071 = sld [smem:[#allocation6 + $0x17]]
        %1072 = vrot.lane.b32.xlu0 %v253, 31
        %v1073 = vpop.permute.xlu0 %1072
        %1074 = vrot.lane.b32.xlu0 %v254, 31
        %v1075 = vpop.permute.xlu0 %1074
        %1076 = vrot.lane.b32.xlu0 0.0, 31
        %v1077 = vpop.permute.xlu0 %1076
        %vm1078 = vcmp.lt.s32.totalorder %v283, 31
        %v1079 = vsel %vm1078, %v1073, %v1075
        %v1080 = vsel %vm1078, %v1077, %v1073
        %1081 = vrot.lane.b32.xlu0 %v266, 31
        %v1082 = vpop.permute.xlu0 %1081
        %1083 = vrot.lane.b32.xlu0 %v273, 31
        %v1084 = vpop.permute.xlu0 %1083
        %v1085 = vsel %vm1078, %v1082, %v1084
        %v1086 = vsel %vm1078, %v1077, %v1082
        %v1087 = vstv %s1070
        %v1088 = vmul.f32 %v1080, %v1087
        %v1089 = vmul.f32 %v1079, %v1087
        %v1090 = vstv %s1071
        %v1091 = vmul.f32 %v1086, %v1090
        %v1092 = vmul.f32 %v1085, %v1090
        %v1093 = vadd.f32 %v1088, %v1091
        %v1094 = vadd.f32 %v1089, %v1092
        %v1095 = vadd.f32 %v1068, %v1093
        %v1096 = vadd.f32 %v1069, %v1094
        %s1097 = sld [smem:[#allocation6 + $0x24]]
        %s1098 = sld [smem:[#allocation6 + $0x25]]
        %1099 = vrot.lane.b32.xlu0 %v253, 15
        %v1100 = vpop.permute.xlu0 %1099
        %1101 = vrot.lane.b32.xlu0 %v254, 15
        %v1102 = vpop.permute.xlu0 %1101
        %1103 = vrot.lane.b32.xlu0 0.0, 15
        %v1104 = vpop.permute.xlu0 %1103
        %vm1105 = vcmp.lt.s32.totalorder %v283, 15
        %v1106 = vsel %vm1105, %v1100, %v1102
        %v1107 = vsel %vm1105, %v1104, %v1100
        %1108 = vrot.lane.b32.xlu0 %v266, 15
        %v1109 = vpop.permute.xlu0 %1108
        %1110 = vrot.lane.b32.xlu0 %v273, 15
        %v1111 = vpop.permute.xlu0 %1110
        %v1112 = vsel %vm1105, %v1109, %v1111
        %v1113 = vsel %vm1105, %v1104, %v1109
        %v1114 = vstv %s1097
        %v1115 = vmul.f32 %v1107, %v1114
        %v1116 = vmul.f32 %v1106, %v1114
        %v1117 = vstv %s1098
        %v1118 = vmul.f32 %v1113, %v1117
        %v1119 = vmul.f32 %v1112, %v1117
        %v1120 = vadd.f32 %v1115, %v1118
        %v1121 = vadd.f32 %v1116, %v1119
        %v1122 = vadd.f32 %v1095, %v1120
        %v1123 = vadd.f32 %v1096, %v1121
        %s1124 = sld [smem:[#allocation6 + $0x32]]
        %s1125 = sld [smem:[#allocation6 + $0x33]]
        %1126 = vrot.lane.b32.xlu0 %v253, 127
        %v1127 = vpop.permute.xlu0 %1126
        %1128 = vrot.lane.b32.xlu0 %v254, 127
        %v1129 = vpop.permute.xlu0 %1128
        %1130 = vrot.lane.b32.xlu0 0.0, 127
        %v1131 = vpop.permute.xlu0 %1130
        %vm1132 = vcmp.lt.s32.totalorder %v283, 127
        %v1133 = vsel %vm1132, %v1129, %v1131
        %v1134 = vsel %vm1132, %v1127, %v1129
        %1135 = vrot.lane.b32.xlu0 %v266, 127
        %v1136 = vpop.permute.xlu0 %1135
        %1137 = vrot.lane.b32.xlu0 %v273, 127
        %v1138 = vpop.permute.xlu0 %1137
        %v1139 = vsel %vm1132, %v1138, %v1131
        %v1140 = vsel %vm1132, %v1136, %v1138
        %v1141 = vstv %s1124
        %v1142 = vmul.f32 %v1134, %v1141
        %v1143 = vmul.f32 %v1133, %v1141
        %v1144 = vstv %s1125
        %v1145 = vmul.f32 %v1140, %v1144
        %v1146 = vmul.f32 %v1139, %v1144
        %v1147 = vadd.f32 %v1142, %v1145
        %v1148 = vadd.f32 %v1143, %v1146
        %v1149 = vadd.f32 %v1122, %v1147
        %v1150 = vadd.f32 %v1123, %v1148
        %s1151 = sld [smem:[#allocation6 + $0x40]]
        %s1152 = sld [smem:[#allocation6 + $0x41]]
        %1153 = vrot.lane.b32.xlu0 %v253, 111
        %v1154 = vpop.permute.xlu0 %1153
        %1155 = vrot.lane.b32.xlu0 %v254, 111
        %v1156 = vpop.permute.xlu0 %1155
        %1157 = vrot.lane.b32.xlu0 0.0, 111
        %v1158 = vpop.permute.xlu0 %1157
        %vm1159 = vcmp.lt.s32.totalorder %v283, 111
        %v1160 = vsel %vm1159, %v1156, %v1158
        %v1161 = vsel %vm1159, %v1154, %v1156
        %1162 = vrot.lane.b32.xlu0 %v266, 111
        %v1163 = vpop.permute.xlu0 %1162
        %1164 = vrot.lane.b32.xlu0 %v273, 111
        %v1165 = vpop.permute.xlu0 %1164
        %v1166 = vsel %vm1159, %v1165, %v1158
        %v1167 = vsel %vm1159, %v1163, %v1165
        %v1168 = vstv %s1151
        %v1169 = vmul.f32 %v1161, %v1168
        %v1170 = vmul.f32 %v1160, %v1168
        %v1171 = vstv %s1152
        %v1172 = vmul.f32 %v1167, %v1171
        %v1173 = vmul.f32 %v1166, %v1171
        %v1174 = vadd.f32 %v1169, %v1172
        %v1175 = vadd.f32 %v1170, %v1173
        %v1176 = vadd.f32 %v1149, %v1174
        %v1177 = vadd.f32 %v1150, %v1175
        %s1178 = sld [smem:[#allocation6 + $0x4e]]
        %s1179 = sld [smem:[#allocation6 + $0x4f]]
        %1180 = vrot.lane.b32.xlu0 %v253, 95
        %v1181 = vpop.permute.xlu0 %1180
        %1182 = vrot.lane.b32.xlu0 %v254, 95
        %v1183 = vpop.permute.xlu0 %1182
        %1184 = vrot.lane.b32.xlu0 0.0, 95
        %v1185 = vpop.permute.xlu0 %1184
        %vm1186 = vcmp.lt.s32.totalorder %v283, 95
        %v1187 = vsel %vm1186, %v1183, %v1185
        %v1188 = vsel %vm1186, %v1181, %v1183
        %1189 = vrot.lane.b32.xlu0 %v266, 95
        %v1190 = vpop.permute.xlu0 %1189
        %1191 = vrot.lane.b32.xlu0 %v273, 95
        %v1192 = vpop.permute.xlu0 %1191
        %v1193 = vsel %vm1186, %v1192, %v1185
        %v1194 = vsel %vm1186, %v1190, %v1192
        %v1195 = vstv %s1178
        %v1196 = vmul.f32 %v1188, %v1195
        %v1197 = vmul.f32 %v1187, %v1195
        %v1198 = vstv %s1179
        %v1199 = vmul.f32 %v1194, %v1198
        %v1200 = vmul.f32 %v1193, %v1198
        %v1201 = vadd.f32 %v1196, %v1199
        %v1202 = vadd.f32 %v1197, %v1200
        %v1203 = vadd.f32 %v1176, %v1201
        %v1204 = vadd.f32 %v1177, %v1202
        %s1205 = sld [smem:[#allocation6 + $0x5c]]
        %s1206 = sld [smem:[#allocation6 + $0x5d]]
        %1207 = vrot.lane.b32.xlu0 %v253, 79
        %v1208 = vpop.permute.xlu0 %1207
        %1209 = vrot.lane.b32.xlu0 %v254, 79
        %v1210 = vpop.permute.xlu0 %1209
        %1211 = vrot.lane.b32.xlu0 0.0, 79
        %v1212 = vpop.permute.xlu0 %1211
        %vm1213 = vcmp.lt.s32.totalorder %v283, 79
        %v1214 = vsel %vm1213, %v1210, %v1212
        %v1215 = vsel %vm1213, %v1208, %v1210
        %1216 = vrot.lane.b32.xlu0 %v266, 79
        %v1217 = vpop.permute.xlu0 %1216
        %1218 = vrot.lane.b32.xlu0 %v273, 79
        %v1219 = vpop.permute.xlu0 %1218
        %v1220 = vsel %vm1213, %v1219, %v1212
        %v1221 = vsel %vm1213, %v1217, %v1219
        %v1222 = vstv %s1205
        %v1223 = vmul.f32 %v1215, %v1222
        %v1224 = vmul.f32 %v1214, %v1222
        %v1225 = vstv %s1206
        %v1226 = vmul.f32 %v1221, %v1225
        %v1227 = vmul.f32 %v1220, %v1225
        %v1228 = vadd.f32 %v1223, %v1226
        %v1229 = vadd.f32 %v1224, %v1227
        %v1230 = vadd.f32 %v1203, %v1228
        %v1231 = vadd.f32 %v1204, %v1229
        %v1233 = vperm.slane %v226, 0
        %v1234 = vperm.slane %v226, 1
        %v1237 = vmul.f32 %v1230, %v1233
        %v1238 = vmul.f32 %v1231, %v1234
        %v1239 = vadd.f32 %v1043, %v1237
        %v1240 = vadd.f32 %v1044, %v1238
        %s1241 = sld [smem:[#allocation6 + $0xa]]
        %s1242 = sld [smem:[#allocation6 + $0xb]]
        %1243 = vrot.lane.b32.xlu0 %v253, 46
        %v1244 = vpop.permute.xlu0 %1243
        %1245 = vrot.lane.b32.xlu0 %v254, 46
        %v1246 = vpop.permute.xlu0 %1245
        %1247 = vrot.lane.b32.xlu0 0.0, 46
        %v1248 = vpop.permute.xlu0 %1247
        %vm1249 = vcmp.lt.s32.totalorder %v283, 46
        %v1250 = vsel %vm1249, %v1244, %v1246
        %v1251 = vsel %vm1249, %v1248, %v1244
        %1252 = vrot.lane.b32.xlu0 %v266, 46
        %v1253 = vpop.permute.xlu0 %1252
        %1254 = vrot.lane.b32.xlu0 %v273, 46
        %v1255 = vpop.permute.xlu0 %1254
        %v1256 = vsel %vm1249, %v1253, %v1255
        %v1257 = vsel %vm1249, %v1248, %v1253
        %v1258 = vstv %s1241
        %v1259 = vmul.f32 %v1251, %v1258
        %v1260 = vmul.f32 %v1250, %v1258
        %v1261 = vstv %s1242
        %v1262 = vmul.f32 %v1257, %v1261
        %v1263 = vmul.f32 %v1256, %v1261
        %v1264 = vadd.f32 %v1259, %v1262
        %v1265 = vadd.f32 %v1260, %v1263
        %s1266 = sld [smem:[#allocation6 + $0x18]]
        %s1267 = sld [smem:[#allocation6 + $0x19]]
        %1268 = vrot.lane.b32.xlu0 %v253, 30
        %v1269 = vpop.permute.xlu0 %1268
        %1270 = vrot.lane.b32.xlu0 %v254, 30
        %v1271 = vpop.permute.xlu0 %1270
        %1272 = vrot.lane.b32.xlu0 0.0, 30
        %v1273 = vpop.permute.xlu0 %1272
        %vm1274 = vcmp.lt.s32.totalorder %v283, 30
        %v1275 = vsel %vm1274, %v1269, %v1271
        %v1276 = vsel %vm1274, %v1273, %v1269
        %1277 = vrot.lane.b32.xlu0 %v266, 30
        %v1278 = vpop.permute.xlu0 %1277
        %1279 = vrot.lane.b32.xlu0 %v273, 30
        %v1280 = vpop.permute.xlu0 %1279
        %v1281 = vsel %vm1274, %v1278, %v1280
        %v1282 = vsel %vm1274, %v1273, %v1278
        %v1283 = vstv %s1266
        %v1284 = vmul.f32 %v1276, %v1283
        %v1285 = vmul.f32 %v1275, %v1283
        %v1286 = vstv %s1267
        %v1287 = vmul.f32 %v1282, %v1286
        %v1288 = vmul.f32 %v1281, %v1286
        %v1289 = vadd.f32 %v1284, %v1287
        %v1290 = vadd.f32 %v1285, %v1288
        %v1291 = vadd.f32 %v1264, %v1289
        %v1292 = vadd.f32 %v1265, %v1290
        %s1293 = sld [smem:[#allocation6 + $0x26]]
        %s1294 = sld [smem:[#allocation6 + $0x27]]
        %1295 = vrot.lane.b32.xlu0 %v253, 14
        %v1296 = vpop.permute.xlu0 %1295
        %1297 = vrot.lane.b32.xlu0 %v254, 14
        %v1298 = vpop.permute.xlu0 %1297
        %1299 = vrot.lane.b32.xlu0 0.0, 14
        %v1300 = vpop.permute.xlu0 %1299
        %vm1301 = vcmp.lt.s32.totalorder %v283, 14
        %v1302 = vsel %vm1301, %v1296, %v1298
        %v1303 = vsel %vm1301, %v1300, %v1296
        %1304 = vrot.lane.b32.xlu0 %v266, 14
        %v1305 = vpop.permute.xlu0 %1304
        %1306 = vrot.lane.b32.xlu0 %v273, 14
        %v1307 = vpop.permute.xlu0 %1306
        %v1308 = vsel %vm1301, %v1305, %v1307
        %v1309 = vsel %vm1301, %v1300, %v1305
        %v1310 = vstv %s1293
        %v1311 = vmul.f32 %v1303, %v1310
        %v1312 = vmul.f32 %v1302, %v1310
        %v1313 = vstv %s1294
        %v1314 = vmul.f32 %v1309, %v1313
        %v1315 = vmul.f32 %v1308, %v1313
        %v1316 = vadd.f32 %v1311, %v1314
        %v1317 = vadd.f32 %v1312, %v1315
        %v1318 = vadd.f32 %v1291, %v1316
        %v1319 = vadd.f32 %v1292, %v1317
        %s1320 = sld [smem:[#allocation6 + $0x34]]
        %s1321 = sld [smem:[#allocation6 + $0x35]]
        %1322 = vrot.lane.b32.xlu0 %v253, 126
        %v1323 = vpop.permute.xlu0 %1322
        %1324 = vrot.lane.b32.xlu0 %v254, 126
        %v1325 = vpop.permute.xlu0 %1324
        %1326 = vrot.lane.b32.xlu0 0.0, 126
        %v1327 = vpop.permute.xlu0 %1326
        %vm1328 = vcmp.lt.s32.totalorder %v283, 126
        %v1329 = vsel %vm1328, %v1325, %v1327
        %v1330 = vsel %vm1328, %v1323, %v1325
        %1331 = vrot.lane.b32.xlu0 %v266, 126
        %v1332 = vpop.permute.xlu0 %1331
        %1333 = vrot.lane.b32.xlu0 %v273, 126
        %v1334 = vpop.permute.xlu0 %1333
        %v1335 = vsel %vm1328, %v1334, %v1327
        %v1336 = vsel %vm1328, %v1332, %v1334
        %v1337 = vstv %s1320
        %v1338 = vmul.f32 %v1330, %v1337
        %v1339 = vmul.f32 %v1329, %v1337
        %v1340 = vstv %s1321
        %v1341 = vmul.f32 %v1336, %v1340
        %v1342 = vmul.f32 %v1335, %v1340
        %v1343 = vadd.f32 %v1338, %v1341
        %v1344 = vadd.f32 %v1339, %v1342
        %v1345 = vadd.f32 %v1318, %v1343
        %v1346 = vadd.f32 %v1319, %v1344
        %s1347 = sld [smem:[#allocation6 + $0x42]]
        %s1348 = sld [smem:[#allocation6 + $0x43]]
        %1349 = vrot.lane.b32.xlu0 %v253, 110
        %v1350 = vpop.permute.xlu0 %1349
        %1351 = vrot.lane.b32.xlu0 %v254, 110
        %v1352 = vpop.permute.xlu0 %1351
        %1353 = vrot.lane.b32.xlu0 0.0, 110
        %v1354 = vpop.permute.xlu0 %1353
        %vm1355 = vcmp.lt.s32.totalorder %v283, 110
        %v1356 = vsel %vm1355, %v1352, %v1354
        %v1357 = vsel %vm1355, %v1350, %v1352
        %1358 = vrot.lane.b32.xlu0 %v266, 110
        %v1359 = vpop.permute.xlu0 %1358
        %1360 = vrot.lane.b32.xlu0 %v273, 110
        %v1361 = vpop.permute.xlu0 %1360
        %v1362 = vsel %vm1355, %v1361, %v1354
        %v1363 = vsel %vm1355, %v1359, %v1361
        %v1364 = vstv %s1347
        %v1365 = vmul.f32 %v1357, %v1364
        %v1366 = vmul.f32 %v1356, %v1364
        %v1367 = vstv %s1348
        %v1368 = vmul.f32 %v1363, %v1367
        %v1369 = vmul.f32 %v1362, %v1367
        %v1370 = vadd.f32 %v1365, %v1368
        %v1371 = vadd.f32 %v1366, %v1369
        %v1372 = vadd.f32 %v1345, %v1370
        %v1373 = vadd.f32 %v1346, %v1371
        %s1374 = sld [smem:[#allocation6 + $0x50]]
        %s1375 = sld [smem:[#allocation6 + $0x51]]
        %1376 = vrot.lane.b32.xlu0 %v253, 94
        %v1377 = vpop.permute.xlu0 %1376
        %1378 = vrot.lane.b32.xlu0 %v254, 94
        %v1379 = vpop.permute.xlu0 %1378
        %1380 = vrot.lane.b32.xlu0 0.0, 94
        %v1381 = vpop.permute.xlu0 %1380
        %vm1382 = vcmp.lt.s32.totalorder %v283, 94
        %v1383 = vsel %vm1382, %v1379, %v1381
        %v1384 = vsel %vm1382, %v1377, %v1379
        %1385 = vrot.lane.b32.xlu0 %v266, 94
        %v1386 = vpop.permute.xlu0 %1385
        %1387 = vrot.lane.b32.xlu0 %v273, 94
        %v1388 = vpop.permute.xlu0 %1387
        %v1389 = vsel %vm1382, %v1388, %v1381
        %v1390 = vsel %vm1382, %v1386, %v1388
        %v1391 = vstv %s1374
        %v1392 = vmul.f32 %v1384, %v1391
        %v1393 = vmul.f32 %v1383, %v1391
        %v1394 = vstv %s1375
        %v1395 = vmul.f32 %v1390, %v1394
        %v1396 = vmul.f32 %v1389, %v1394
        %v1397 = vadd.f32 %v1392, %v1395
        %v1398 = vadd.f32 %v1393, %v1396
        %v1399 = vadd.f32 %v1372, %v1397
        %v1400 = vadd.f32 %v1373, %v1398
        %s1401 = sld [smem:[#allocation6 + $0x5e]]
        %s1402 = sld [smem:[#allocation6 + $0x5f]]
        %1403 = vrot.lane.b32.xlu0 %v253, 78
        %v1404 = vpop.permute.xlu0 %1403
        %1405 = vrot.lane.b32.xlu0 %v254, 78
        %v1406 = vpop.permute.xlu0 %1405
        %1407 = vrot.lane.b32.xlu0 0.0, 78
        %v1408 = vpop.permute.xlu0 %1407
        %vm1409 = vcmp.lt.s32.totalorder %v283, 78
        %v1410 = vsel %vm1409, %v1406, %v1408
        %v1411 = vsel %vm1409, %v1404, %v1406
        %1412 = vrot.lane.b32.xlu0 %v266, 78
        %v1413 = vpop.permute.xlu0 %1412
        %1414 = vrot.lane.b32.xlu0 %v273, 78
        %v1415 = vpop.permute.xlu0 %1414
        %v1416 = vsel %vm1409, %v1415, %v1408
        %v1417 = vsel %vm1409, %v1413, %v1415
        %v1418 = vstv %s1401
        %v1419 = vmul.f32 %v1411, %v1418
        %v1420 = vmul.f32 %v1410, %v1418
        %v1421 = vstv %s1402
        %v1422 = vmul.f32 %v1417, %v1421
        %v1423 = vmul.f32 %v1416, %v1421
        %v1424 = vadd.f32 %v1419, %v1422
        %v1425 = vadd.f32 %v1420, %v1423
        %v1426 = vadd.f32 %v1399, %v1424
        %v1427 = vadd.f32 %v1400, %v1425
        %v1429 = vperm.slane %v228, 0
        %v1430 = vperm.slane %v228, 1
        %v1433 = vmul.f32 %v1426, %v1429
        %v1434 = vmul.f32 %v1427, %v1430
        %v1435 = vadd.f32 %v1239, %v1433
        %v1436 = vadd.f32 %v1240, %v1434
        %s1437 = sld [smem:[#allocation6 + $0xc]]
        %s1438 = sld [smem:[#allocation6 + $0xd]]
        %1439 = vrot.lane.b32.xlu0 %v253, 45
        %v1440 = vpop.permute.xlu0 %1439
        %1441 = vrot.lane.b32.xlu0 %v254, 45
        %v1442 = vpop.permute.xlu0 %1441
        %1443 = vrot.lane.b32.xlu0 0.0, 45
        %v1444 = vpop.permute.xlu0 %1443
        %vm1445 = vcmp.lt.s32.totalorder %v283, 45
        %v1446 = vsel %vm1445, %v1440, %v1442
        %v1447 = vsel %vm1445, %v1444, %v1440
        %1448 = vrot.lane.b32.xlu0 %v266, 45
        %v1449 = vpop.permute.xlu0 %1448
        %1450 = vrot.lane.b32.xlu0 %v273, 45
        %v1451 = vpop.permute.xlu0 %1450
        %v1452 = vsel %vm1445, %v1449, %v1451
        %v1453 = vsel %vm1445, %v1444, %v1449
        %v1454 = vstv %s1437
        %v1455 = vmul.f32 %v1447, %v1454
        %v1456 = vmul.f32 %v1446, %v1454
        %v1457 = vstv %s1438
        %v1458 = vmul.f32 %v1453, %v1457
        %v1459 = vmul.f32 %v1452, %v1457
        %v1460 = vadd.f32 %v1455, %v1458
        %v1461 = vadd.f32 %v1456, %v1459
        %s1462 = sld [smem:[#allocation6 + $0x1a]]
        %s1463 = sld [smem:[#allocation6 + $0x1b]]
        %1464 = vrot.lane.b32.xlu0 %v253, 29
        %v1465 = vpop.permute.xlu0 %1464
        %1466 = vrot.lane.b32.xlu0 %v254, 29
        %v1467 = vpop.permute.xlu0 %1466
        %1468 = vrot.lane.b32.xlu0 0.0, 29
        %v1469 = vpop.permute.xlu0 %1468
        %vm1470 = vcmp.lt.s32.totalorder %v283, 29
        %v1471 = vsel %vm1470, %v1465, %v1467
        %v1472 = vsel %vm1470, %v1469, %v1465
        %1473 = vrot.lane.b32.xlu0 %v266, 29
        %v1474 = vpop.permute.xlu0 %1473
        %1475 = vrot.lane.b32.xlu0 %v273, 29
        %v1476 = vpop.permute.xlu0 %1475
        %v1477 = vsel %vm1470, %v1474, %v1476
        %v1478 = vsel %vm1470, %v1469, %v1474
        %v1479 = vstv %s1462
        %v1480 = vmul.f32 %v1472, %v1479
        %v1481 = vmul.f32 %v1471, %v1479
        %v1482 = vstv %s1463
        %v1483 = vmul.f32 %v1478, %v1482
        %v1484 = vmul.f32 %v1477, %v1482
        %v1485 = vadd.f32 %v1480, %v1483
        %v1486 = vadd.f32 %v1481, %v1484
        %v1487 = vadd.f32 %v1460, %v1485
        %v1488 = vadd.f32 %v1461, %v1486
        %s1489 = sld [smem:[#allocation6 + $0x28]]
        %s1490 = sld [smem:[#allocation6 + $0x29]]
        %1491 = vrot.lane.b32.xlu0 %v253, 13
        %v1492 = vpop.permute.xlu0 %1491
        %1493 = vrot.lane.b32.xlu0 %v254, 13
        %v1494 = vpop.permute.xlu0 %1493
        %1495 = vrot.lane.b32.xlu0 0.0, 13
        %v1496 = vpop.permute.xlu0 %1495
        %vm1497 = vcmp.lt.s32.totalorder %v283, 13
        %v1498 = vsel %vm1497, %v1492, %v1494
        %v1499 = vsel %vm1497, %v1496, %v1492
        %1500 = vrot.lane.b32.xlu0 %v266, 13
        %v1501 = vpop.permute.xlu0 %1500
        %1502 = vrot.lane.b32.xlu0 %v273, 13
        %v1503 = vpop.permute.xlu0 %1502
        %v1504 = vsel %vm1497, %v1501, %v1503
        %v1505 = vsel %vm1497, %v1496, %v1501
        %v1506 = vstv %s1489
        %v1507 = vmul.f32 %v1499, %v1506
        %v1508 = vmul.f32 %v1498, %v1506
        %v1509 = vstv %s1490
        %v1510 = vmul.f32 %v1505, %v1509
        %v1511 = vmul.f32 %v1504, %v1509
        %v1512 = vadd.f32 %v1507, %v1510
        %v1513 = vadd.f32 %v1508, %v1511
        %v1514 = vadd.f32 %v1487, %v1512
        %v1515 = vadd.f32 %v1488, %v1513
        %s1516 = sld [smem:[#allocation6 + $0x36]]
        %s1517 = sld [smem:[#allocation6 + $0x37]]
        %1518 = vrot.lane.b32.xlu0 %v253, 125
        %v1519 = vpop.permute.xlu0 %1518
        %1520 = vrot.lane.b32.xlu0 %v254, 125
        %v1521 = vpop.permute.xlu0 %1520
        %1522 = vrot.lane.b32.xlu0 0.0, 125
        %v1523 = vpop.permute.xlu0 %1522
        %vm1524 = vcmp.lt.s32.totalorder %v283, 125
        %v1525 = vsel %vm1524, %v1521, %v1523
        %v1526 = vsel %vm1524, %v1519, %v1521
        %1527 = vrot.lane.b32.xlu0 %v266, 125
        %v1528 = vpop.permute.xlu0 %1527
        %1529 = vrot.lane.b32.xlu0 %v273, 125
        %v1530 = vpop.permute.xlu0 %1529
        %v1531 = vsel %vm1524, %v1530, %v1523
        %v1532 = vsel %vm1524, %v1528, %v1530
        %v1533 = vstv %s1516
        %v1534 = vmul.f32 %v1526, %v1533
        %v1535 = vmul.f32 %v1525, %v1533
        %v1536 = vstv %s1517
        %v1537 = vmul.f32 %v1532, %v1536
        %v1538 = vmul.f32 %v1531, %v1536
        %v1539 = vadd.f32 %v1534, %v1537
        %v1540 = vadd.f32 %v1535, %v1538
        %v1541 = vadd.f32 %v1514, %v1539
        %v1542 = vadd.f32 %v1515, %v1540
        %s1543 = sld [smem:[#allocation6 + $0x44]]
        %s1544 = sld [smem:[#allocation6 + $0x45]]
        %1545 = vrot.lane.b32.xlu0 %v253, 109
        %v1546 = vpop.permute.xlu0 %1545
        %1547 = vrot.lane.b32.xlu0 %v254, 109
        %v1548 = vpop.permute.xlu0 %1547
        %1549 = vrot.lane.b32.xlu0 0.0, 109
        %v1550 = vpop.permute.xlu0 %1549
        %vm1551 = vcmp.lt.s32.totalorder %v283, 109
        %v1552 = vsel %vm1551, %v1548, %v1550
        %v1553 = vsel %vm1551, %v1546, %v1548
        %1554 = vrot.lane.b32.xlu0 %v266, 109
        %v1555 = vpop.permute.xlu0 %1554
        %1556 = vrot.lane.b32.xlu0 %v273, 109
        %v1557 = vpop.permute.xlu0 %1556
        %v1558 = vsel %vm1551, %v1557, %v1550
        %v1559 = vsel %vm1551, %v1555, %v1557
        %v1560 = vstv %s1543
        %v1561 = vmul.f32 %v1553, %v1560
        %v1562 = vmul.f32 %v1552, %v1560
        %v1563 = vstv %s1544
        %v1564 = vmul.f32 %v1559, %v1563
        %v1565 = vmul.f32 %v1558, %v1563
        %v1566 = vadd.f32 %v1561, %v1564
        %v1567 = vadd.f32 %v1562, %v1565
        %v1568 = vadd.f32 %v1541, %v1566
        %v1569 = vadd.f32 %v1542, %v1567
        %s1570 = sld [smem:[#allocation6 + $0x52]]
        %s1571 = sld [smem:[#allocation6 + $0x53]]
        %1572 = vrot.lane.b32.xlu0 %v253, 93
        %v1573 = vpop.permute.xlu0 %1572
        %1574 = vrot.lane.b32.xlu0 %v254, 93
        %v1575 = vpop.permute.xlu0 %1574
        %1576 = vrot.lane.b32.xlu0 0.0, 93
        %v1577 = vpop.permute.xlu0 %1576
        %vm1578 = vcmp.lt.s32.totalorder %v283, 93
        %v1579 = vsel %vm1578, %v1575, %v1577
        %v1580 = vsel %vm1578, %v1573, %v1575
        %1581 = vrot.lane.b32.xlu0 %v266, 93
        %v1582 = vpop.permute.xlu0 %1581
        %1583 = vrot.lane.b32.xlu0 %v273, 93
        %v1584 = vpop.permute.xlu0 %1583
        %v1585 = vsel %vm1578, %v1584, %v1577
        %v1586 = vsel %vm1578, %v1582, %v1584
        %v1587 = vstv %s1570
        %v1588 = vmul.f32 %v1580, %v1587
        %v1589 = vmul.f32 %v1579, %v1587
        %v1590 = vstv %s1571
        %v1591 = vmul.f32 %v1586, %v1590
        %v1592 = vmul.f32 %v1585, %v1590
        %v1593 = vadd.f32 %v1588, %v1591
        %v1594 = vadd.f32 %v1589, %v1592
        %v1595 = vadd.f32 %v1568, %v1593
        %v1596 = vadd.f32 %v1569, %v1594
        %s1597 = sld [smem:[#allocation6 + $0x60]]
        %s1598 = sld [smem:[#allocation6 + $0x61]]
        %1599 = vrot.lane.b32.xlu0 %v253, 77
        %v1600 = vpop.permute.xlu0 %1599
        %1601 = vrot.lane.b32.xlu0 %v254, 77
        %v1602 = vpop.permute.xlu0 %1601
        %1603 = vrot.lane.b32.xlu0 0.0, 77
        %v1604 = vpop.permute.xlu0 %1603
        %vm1605 = vcmp.lt.s32.totalorder %v283, 77
        %v1606 = vsel %vm1605, %v1602, %v1604
        %v1607 = vsel %vm1605, %v1600, %v1602
        %1608 = vrot.lane.b32.xlu0 %v266, 77
        %v1609 = vpop.permute.xlu0 %1608
        %1610 = vrot.lane.b32.xlu0 %v273, 77
        %v1611 = vpop.permute.xlu0 %1610
        %v1612 = vsel %vm1605, %v1611, %v1604
        %v1613 = vsel %vm1605, %v1609, %v1611
        %v1614 = vstv %s1597
        %v1615 = vmul.f32 %v1607, %v1614
        %v1616 = vmul.f32 %v1606, %v1614
        %v1617 = vstv %s1598
        %v1618 = vmul.f32 %v1613, %v1617
        %v1619 = vmul.f32 %v1612, %v1617
        %v1620 = vadd.f32 %v1615, %v1618
        %v1621 = vadd.f32 %v1616, %v1619
        %v1622 = vadd.f32 %v1595, %v1620
        %v1623 = vadd.f32 %v1596, %v1621
        %v1625 = vperm.slane %v230, 0
        %v1626 = vperm.slane %v230, 1
        %v1629 = vmul.f32 %v1622, %v1625
        %v1630 = vmul.f32 %v1623, %v1626
        %v1631 = vadd.f32 %v1435, %v1629
        %v1632 = vadd.f32 %v1436, %v1630
        %v1633 = vxor.u32 %v1631, 2147483648
        %v1634 = vxor.u32 %v1632, 2147483648
        %v1635 = vmul.f32 %v1633, 1.442695
        %v1636 = vpow.pop %v1635
        %v1637 = vmul.f32 %v1634, 1.442695
        %v1638 = vpow.pop %v1637
        %v1639 = vadd.f32 %v1636, 1.0
        %v1640 = vadd.f32 %v1638, 1.0
        %v1641 = vrcp.pop %v1639
        %v1642 = vmul.f32 %v1639, %v1641
        %v1643 = vsub.f32 1.0, %v1642
        %v1644 = vmul.f32 %v1641, %v1643
        %v1645 = vadd.f32 %v1641, %v1644
        %vm1646 = vweird.f32 %v1639
        %vm1647 = vweird.f32 %v1641
        %vm1648 = vmor %vm1646, %vm1647
        %v1649 = vsel %vm1648, %v1641, %v1645
        %v1650 = vand.u32 2147483647, %v1639
        %vm1651 = vcmp.eq.f32.partialorder %v1650, 8.507059e+37
        %v1652 = vand.u32 %v1639, 2147483648
        %v1653 = vor.u32 1.1754944e-38, %v1652
        %v1654 = vsel %vm1651, %v1653, %v1649
        %v1655 = vmul.f32 1.0, %v1654
        %v1656 = vrcp.pop %v1640
        %v1657 = vmul.f32 %v1640, %v1656
        %v1658 = vsub.f32 1.0, %v1657
        %v1659 = vmul.f32 %v1656, %v1658
        %v1660 = vadd.f32 %v1656, %v1659
        %vm1661 = vweird.f32 %v1640
        %vm1662 = vweird.f32 %v1656
        %vm1663 = vmor %vm1661, %vm1662
        %v1664 = vsel %vm1663, %v1656, %v1660
        %v1665 = vand.u32 2147483647, %v1640
        %vm1666 = vcmp.eq.f32.partialorder %v1665, 8.507059e+37
        %v1667 = vand.u32 %v1640, 2147483648
        %v1668 = vor.u32 1.1754944e-38, %v1667
        %v1669 = vsel %vm1666, %v1668, %v1664
        %v1670 = vmul.f32 1.0, %v1669
        %v1671 = vperm.slane %v1655, 0
        %v1672 = vperm.slane %v1670, 0
        %v1675 = vrot.slane %v1672, 4
        %v1676 = vsel %vm238, %v1671, %v1675
        %v1678 = vmul.f32 %v231, %v1676
        %1679 = vst [vmem:[%s217] sm:$0xff] %v1678
        %s1680 = sand.u32 %s98, 1
        %s1681 = scalar_lea.sflag [#allocation4], %s1680
        %s1682 = sand.u32 %s98, 1
        %s1683 = smul.addr %s1682, 8
        %s1684 = scalar_lea.vmem [#allocation9], %s1683
        // Predicated region
        $region45: #{tpu_custom_call.1} parent=31 // pred_check
          %p1685 = pneg %p108
        $region46: #{tpu_custom_call.1} parent=31 // pred_check_branch
          %1687 = sbr.rel (%p1685) target = $region48
        $region47: #{tpu_custom_call.1} parent=31 // pred_region
          %1689 = vsyncadd %s1681, 0
          %s1690 = smul.addr %s22, 2
          %s1691 = smul.addr %s1690, 4
          %s1692 = scalar_lea.hbm %s3, %s1691
          %s1694 = sshll.u32 %s1684, 4
          %s1695 = int_to_ptr.vmem [resolvable:$true] %s1694
          %s1696 = sshll.u32 %s1692, 4
          %s1697 = int_to_ptr.hbm [resolvable:$true] %s1696
          %1699 = dma.vmem_to_hbm [thread:$0]  %s1695, 128, %s1697, %s1681
        $region48: #{tpu_custom_call.1} parent=31 // pred_fallthru
          _
      $region32: #{tpu_custom_call.1} parent=5 // pred_fallthru
        _
      %p1700 = scmp.le.s32.totalorder 2, %s17
      // Predicated region
      $region49: #{tpu_custom_call.1} parent=5 // pred_check
        %p1701 = pneg %p1700
      $region50: #{tpu_custom_call.1} parent=5 // pred_check_branch
        %1703 = sbr.rel (%p1701) target = $region52
      $region51: #{tpu_custom_call.1} parent=5 // pred_region
        %s1704 = ssub.s32 %s17, 2
        // Predicated region
        $region53: #{tpu_custom_call.1} parent=51 // pred_check
          %p1705 = pneg %p114
        $region54: #{tpu_custom_call.1} parent=51 // pred_check_branch
          %1707 = sbr.rel (%p1705) target = $region56
        $region55: #{tpu_custom_call.1} parent=51 // pred_region
          %s1708 = sand.u32 %s99, 1
          %s1709 = scalar_lea.sflag [#allocation4], %s1708
          %s1710 = sand.u32 %s99, 1
          %s1711 = smul.addr %s1710, 8
          %s1712 = scalar_lea.vmem [#allocation9], %s1711
          %1714 = dma.done %s1709, 128
        $region56: #{tpu_custom_call.1} parent=51 // pred_fallthru
          _
      $region52: #{tpu_custom_call.1} parent=5 // pred_fallthru
        _
    $region6: #{tpu_custom_call.1} parent=1 // loop_footer
      %s21 = sadd.s32 1, %s17
    $region7: #{tpu_custom_call.1} parent=1 // loop_footer_branch
      %16 = sbr.rel target = $region3
    $region8: #{tpu_custom_call.1} parent=1 // loop_exit
      _
    %1715 = vsyncpa [#allocation3], 1
    %s1716 = scalar_lea.sflag [#allocation3], 1
    %1717 = vsyncpa %s1716, 1
    %1718 = vsyncpa [#allocation8], 1
    %1719 = vsyncpa [#allocation4], 1
    %s1720 = scalar_lea.sflag [#allocation4], 1
    %1721 = vsyncpa %s1720, 1
    %1722 = vsyncpa [#allocation5], 1
    %s1723 = scalar_lea.sflag [#allocation5], 1
    %1724 = vsyncpa %s1723, 1

</llo_original>
